<compile_context>
chip_gen: v7x
topology: tpu7x:2x2x1
jax: 0.10.0
libtpu: 0.0.40
codegen_flags: <defaults>
</compile_context>

<pallas_src>
import functools

import jax
import jax.numpy as jnp
import numpy as np
from jax import lax
from jax.experimental import pallas as pl
from jax.experimental.pallas import tpu as pltpu

SUBLANE = 8
LANE = 128


def _round_up(n, m):
    return ((n + m - 1) // m) * m


def lstm_classifier_kernel(x_ref, w_ih_hbm, w_hh_hbm, b_hbm, w_fc_hbm, b_fc_hbm,
                           out_ref,
                           h_scr, c_scr, gates_scr,
                           w_ih_vmem, w_hh_vmem, b_vmem, w_fc_vmem, b_fc_vmem,
                           dma_sem,
                           *, seq_len, n_classes, needs_time_mask, unroll):
    """One (batch-shard, time-chunk) step of the LSTM; fc+softmax on last chunk."""
    t_blk = pl.program_id(1)
    n_time = pl.num_programs(1)
    TT, BT, _ = x_ref.shape            # x block: (TT, B_TILE, I), time-major
    Hp = h_scr.shape[1]

    @pl.when(t_blk == 0)
    def _init():
        # h_0 = c_0 = 0 (PyTorch default) + one-time weight DMA HBM -> VMEM
        # (per batch shard; weights then stay resident / single-buffered).
        h_scr[...] = jnp.zeros(h_scr.shape, h_scr.dtype)
        c_scr[...] = jnp.zeros(c_scr.shape, c_scr.dtype)
        copies = [
            pltpu.make_async_copy(w_ih_hbm, w_ih_vmem, dma_sem.at[0]),
            pltpu.make_async_copy(w_hh_hbm, w_hh_vmem, dma_sem.at[1]),
            pltpu.make_async_copy(b_hbm, b_vmem, dma_sem.at[2]),
            pltpu.make_async_copy(w_fc_hbm, w_fc_vmem, dma_sem.at[3]),
            pltpu.make_async_copy(b_fc_hbm, b_fc_vmem, dma_sem.at[4]),
        ]
        for cp in copies:
            cp.start()
        for cp in copies:
            cp.wait()

    # ---- hoisted input projection: one big chunk GEMM, bias folded in ----
    x_flat = x_ref[...].reshape(TT * BT, x_ref.shape[2])           # (TT*BT, I)
    gates_scr[...] = (jnp.dot(x_flat, w_ih_vmem[...],
                              preferred_element_type=jnp.float32)
                      + b_vmem[...])                               # (TT*BT, 4Hp) f32

    w_hh = w_hh_vmem[...]                                          # hoisted weight load
    mxu_dtype = w_hh.dtype

    # ---- serial recurrence: only h @ w_hh per step (fori_loop, unrolled) ----
    # TODO(synk): weight-stationary w_hh via pltpu.matmul_push_rhs/acc_lhs/pop
    # would avoid re-feeding the (Hp,4Hp) weight through the MXU every step.
    def step(s, carry):
        h, c = carry
        row = pl.multiple_of(s * BT, 8)
        g_x = gates_scr[pl.ds(row, BT), :]                         # aligned sublane slice
        gates = g_x + jnp.dot(h.astype(mxu_dtype), w_hh,
                              preferred_element_type=jnp.float32)
        i_g = jax.nn.sigmoid(gates[:, 0 * Hp:1 * Hp])              # lane-aligned slices
        f_g = jax.nn.sigmoid(gates[:, 1 * Hp:2 * Hp])
        g_g = jnp.tanh(gates[:, 2 * Hp:3 * Hp])
        o_g = jax.nn.sigmoid(gates[:, 3 * Hp:4 * Hp])
        c_new = f_g * c + i_g * g_g
        h_new = o_g * jnp.tanh(c_new)
        if needs_time_mask:                                        # zero-padded tail steps
            valid = (t_blk * TT + s) < seq_len
            c_new = jnp.where(valid, c_new, c)
            h_new = jnp.where(valid, h_new, h)
        return (h_new, c_new)

    h, c = lax.fori_loop(0, TT, step, (h_scr[...], c_scr[...]), unroll=unroll)
    h_scr[...] = h
    c_scr[...] = c

    # ---- epilogue on last chunk: fc + masked softmax, lane-dense store ----
    @pl.when(t_blk == n_time - 1)
    def _finalize():
        logits = (jnp.dot(h.astype(mxu_dtype), w_fc_vmem[...],
                          preferred_element_type=jnp.float32)
                  + b_fc_vmem[...])                                # (BT, Op) f32
        col = lax.broadcasted_iota(jnp.int32, logits.shape, 1)
        logits = jnp.where(col < n_classes, logits, -1e30)         # mask padded classes
        m = jnp.max(logits, axis=1, keepdims=True)
        e = jnp.exp(logits - m)
        out_ref[...] = e / jnp.sum(e, axis=1, keepdims=True)


def init_torch_params(key, input_size, hidden_size, output_size):
    """PyTorch-layout params, uniform(-1/sqrt(H), 1/sqrt(H)) like nn.LSTM/nn.Linear."""
    k = 1.0 / np.sqrt(hidden_size)
    ks = jax.random.split(key, 6)
    u = lambda kk, shape, bound: jax.random.uniform(
        kk, shape, jnp.float32, minval=-bound, maxval=bound)
    w_ih = u(ks[0], (4 * hidden_size, input_size), k)    # (4H, I)
    w_hh = u(ks[1], (4 * hidden_size, hidden_size), k)   # (4H, H)
    b_ih = u(ks[2], (4 * hidden_size,), k)
    b_hh = u(ks[3], (4 * hidden_size,), k)
    w_fc = u(ks[4], (output_size, hidden_size), k)       # (O, H)
    b_fc = u(ks[5], (output_size,), k)
    return (w_ih, w_hh, b_ih, b_hh, w_fc, b_fc)


def prepare_kernel_params(torch_params, hidden_size, output_size,
                          mxu_dtype=jnp.bfloat16):
    """Transpose + zero-pad PyTorch weights into the lane-aligned kernel layout."""
    w_ih, w_hh, b_ih, b_hh, w_fc, b_fc = torch_params
    input_size = w_ih.shape[1]
    H = hidden_size
    Hp = _round_up(H, LANE)
    Op = _round_up(output_size, LANE)

    w_ih_p = jnp.zeros((input_size, 4 * Hp), jnp.float32)
    w_hh_p = jnp.zeros((Hp, 4 * Hp), jnp.float32)
    b_p = jnp.zeros((1, 4 * Hp), jnp.float32)
    b_sum = b_ih + b_hh
    for g in range(4):                                   # PyTorch gate order i,f,g,o
        w_ih_p = w_ih_p.at[:, g * Hp:g * Hp + H].set(w_ih[g * H:(g + 1) * H, :].T)
        w_hh_p = w_hh_p.at[:H, g * Hp:g * Hp + H].set(w_hh[g * H:(g + 1) * H, :].T)
        b_p = b_p.at[0, g * Hp:g * Hp + H].set(b_sum[g * H:(g + 1) * H])

    w_fc_p = jnp.zeros((Hp, Op), jnp.float32).at[:H, :output_size].set(w_fc.T)
    b_fc_p = jnp.zeros((1, Op), jnp.float32).at[0, :output_size].set(b_fc)
    return (w_ih_p.astype(mxu_dtype), w_hh_p.astype(mxu_dtype), b_p,
            w_fc_p.astype(mxu_dtype), b_fc_p)


def lstm_classifier_forward(x_bti, torch_params, hidden_size, output_size, *,
                            time_block=None, mxu_dtype=jnp.bfloat16):
    """x_bti: (B, T, I) float32 batch-first (as the PyTorch module expects)."""
    B, T, I = x_bti.shape
    Bp = _round_up(B, SUBLANE)
    Hp = _round_up(hidden_size, LANE)
    Op = _round_up(output_size, LANE)

    # Batch sharding across TensorCores (v7x has 2); degenerate for small B.
    n_bshards = 2 if (Bp >= 16 and Bp % 16 == 0) else 1
    BT = Bp // n_bshards

    mxu_bytes = np.dtype(mxu_dtype).itemsize
    try:
        vmem_cap = pltpu.get_tpu_info().vmem_capacity_bytes
    except Exception:
        vmem_cap = 64 * 1024 * 1024            # conservative: v7x per-TC VMEM

    def vmem_needed(tt):
        weights = ((I * 4 * Hp + Hp * 4 * Hp + Hp * Op) * mxu_bytes
                   + (4 * Hp + Op) * 4)                        # single-buffered
        x_chunks = 2 * tt * BT * I * mxu_bytes                 # double-buffered stream
        gates = tt * BT * 4 * Hp * 4                           # f32 gates scratch
        hc = 2 * BT * Hp * 4
        out = 2 * BT * Op * 4
        return weights + x_chunks + gates + hc + out

    if time_block is None:
        # Enough GEMM rows to fill the MXU (TT*BT >= 256), VMEM permitting.
        TT = max(1, min(T, pl.cdiv(256, BT)))
        while TT > 1 and vmem_needed(TT) > int(0.6 * vmem_cap):
            TT -= 1
    else:
        TT = max(1, min(time_block, T))

    n_blk = pl.cdiv(T, TT)
    T_pad = n_blk * TT
    vmem_limit = int(min(0.9 * vmem_cap, vmem_needed(TT) + (16 << 20)))

    w_ih_p, w_hh_p, b_p, w_fc_p, b_fc_p = prepare_kernel_params(
        torch_params, hidden_size, output_size, mxu_dtype)

    # Pad batch/time, convert to time-major (T_pad, Bp, I): each timestep /
    # batch shard is a rectangular BlockSpec tile (single fused pad+transpose).
    x_p = jnp.zeros((T_pad, Bp, I), mxu_dtype)
    x_p = x_p.at[:T, :B, :].set(jnp.transpose(x_bti, (1, 0, 2)).astype(mxu_dtype))

    unroll = TT if TT <= 16 else max(d for d in (8, 4, 2, 1) if TT % d == 0)

    kernel = functools.partial(
        lstm_classifier_kernel,
        seq_len=T, n_classes=output_size,
        needs_time_mask=(T_pad != T), unroll=unroll)

    out_p = pl.pallas_call(
        kernel,
        out_shape=jax.ShapeDtypeStruct((Bp, Op), jnp.float32),
        grid=(n_bshards, n_blk),
        in_specs=[
            pl.BlockSpec((TT, BT, I), lambda b, t: (t, b, 0)),   # streamed x chunk
            pl.BlockSpec(memory_space=pl.ANY),   # w_ih  (HBM; DMA'd once / shard)
            pl.BlockSpec(memory_space=pl.ANY),   # w_hh
            pl.BlockSpec(memory_space=pl.ANY),   # b_ih + b_hh
            pl.BlockSpec(memory_space=pl.ANY),   # w_fc
            pl.BlockSpec(memory_space=pl.ANY),   # b_fc
        ],
        out_specs=pl.BlockSpec((BT, Op), lambda b, t: (b, 0)),   # lane-dense output
        scratch_shapes=[
            pltpu.VMEM((BT, Hp), jnp.float32),           # h_t (persists over time grid)
            pltpu.VMEM((BT, Hp), jnp.float32),           # c_t
            pltpu.VMEM((TT * BT, 4 * Hp), jnp.float32),  # gates_x chunk buffer
            pltpu.VMEM((I, 4 * Hp), mxu_dtype),          # w_ih (single-buffered)
            pltpu.VMEM((Hp, 4 * Hp), mxu_dtype),         # w_hh
            pltpu.VMEM((1, 4 * Hp), jnp.float32),        # bias
            pltpu.VMEM((Hp, Op), mxu_dtype),             # w_fc
            pltpu.VMEM((1, Op), jnp.float32),            # b_fc
            pltpu.SemaphoreType.DMA((5,)),               # weight-load DMAs
        ],
        compiler_params=pltpu.CompilerParams(
            dimension_semantics=("parallel", "arbitrary"),   # batch ∥, time serial
            vmem_limit_bytes=vmem_limit),
    )(x_p, w_ih_p, w_hh_p, b_p, w_fc_p, b_fc_p)

    return out_p[:B, :output_size]


def reference_forward(x_bti, torch_params, hidden_size):
    """Pure-JAX f32 reference with PyTorch semantics (unpadded, lax.scan)."""
    w_ih, w_hh, b_ih, b_hh, w_fc, b_fc = torch_params
    B = x_bti.shape[0]
    H = hidden_size

    def cell(carry, x_t):
        h, c = carry
        gates = x_t @ w_ih.T + h @ w_hh.T + b_ih + b_hh
        i_g = jax.nn.sigmoid(gates[:, 0:H])
        f_g = jax.nn.sigmoid(gates[:, H:2 * H])
        g_g = jnp.tanh(gates[:, 2 * H:3 * H])
        o_g = jax.nn.sigmoid(gates[:, 3 * H:4 * H])
        c_new = f_g * c + i_g * g_g
        h_new = o_g * jnp.tanh(c_new)
        return (h_new, c_new), None

    h0 = jnp.zeros((B, H), jnp.float32)
    (h_T, _), _ = lax.scan(cell, (h0, h0), jnp.transpose(x_bti, (1, 0, 2)))
    logits = h_T @ w_fc.T + b_fc
    return jax.nn.softmax(logits, axis=1)


if __name__ == "__main__":
    B, T, I, H, O = 2, 8, 16, 32, 4

    key = jax.random.PRNGKey(0)
    k_x, k_p = jax.random.split(key)
    x = jax.random.normal(k_x, (B, T, I), jnp.float32)
    torch_params = init_torch_params(k_p, I, H, O)

    ref = reference_forward(x, torch_params, H)

    # (1) Exact f32 MXU path, time_block=3 -> 3 time chunks + masked padded
    #     tail step: exercises streaming, weight DMA persistence, time mask.
    out_f32 = lstm_classifier_forward(x, torch_params, H, O,
                                      time_block=3, mxu_dtype=jnp.float32)
    out_f32 = jax.block_until_ready(out_f32)
    np.testing.assert_allclose(np.asarray(out_f32), np.asarray(ref),
                               rtol=1e-5, atol=1e-5)

    # (2) Default bf16-MXU path with auto chunk sizing (single chunk here).
    out_bf16 = lstm_classifier_forward(x, torch_params, H, O)
    out_bf16 = jax.block_until_ready(out_bf16)
    np.testing.assert_allclose(np.asarray(out_bf16), np.asarray(ref),
                               rtol=2e-2, atol=2e-2)

    assert out_f32.shape == (B, O) and out_bf16.shape == (B, O)
    print("KERNEL_OK")
</pallas_src>

<mosaic_0001>
module attributes {stable_mosaic.version = 11 : i64} {
  func.func @lstm_classifier_kernel(%arg0: i32, %arg1: i32, %arg2: memref<3x8x16xf32, #tpu.memory_space<vmem>>, %arg3: memref<16x512xf32, #tpu.memory_space<any>>, %arg4: memref<128x512xf32, #tpu.memory_space<any>>, %arg5: memref<1x512xf32, #tpu.memory_space<any>>, %arg6: memref<128x128xf32, #tpu.memory_space<any>>, %arg7: memref<1x128xf32, #tpu.memory_space<any>>, %arg8: memref<8x128xf32, #tpu.memory_space<vmem>>, %arg9: memref<8x128xf32, #tpu.memory_space<vmem>>, %arg10: memref<8x128xf32, #tpu.memory_space<vmem>>, %arg11: memref<24x512xf32, #tpu.memory_space<vmem>>, %arg12: memref<16x512xf32, #tpu.memory_space<vmem>>, %arg13: memref<128x512xf32, #tpu.memory_space<vmem>>, %arg14: memref<1x512xf32, #tpu.memory_space<vmem>>, %arg15: memref<128x128xf32, #tpu.memory_space<vmem>>, %arg16: memref<1x128xf32, #tpu.memory_space<vmem>>, %arg17: memref<5x!tpu.dma_semaphore, #tpu.memory_space<semaphore_mem>>) attributes {dimension_semantics = [#tpu.dimension_semantics<parallel>, #tpu.dimension_semantics<arbitrary>], iteration_bounds = array<i64: 1, 3>, scalar_prefetch = 0 : i64, scratch_operands = 9 : i64, tpu.core_type = #tpu.core_type<tc>, window_params = [{transform_indices = @transform_0, window_bounds = array<i64: 3, 8, 16>}, {}, {}, {}, {}, {}, {transform_indices = @transform_6, window_bounds = array<i64: 8, 128>}]} {
    %c0_i32 = arith.constant 0 : i32
    %0 = arith.cmpi eq, %arg1, %c0_i32 : i32
    %1 = arith.extui %0 : i1 to i32
    %c0_i32_0 = arith.constant 0 : i32
    %2 = arith.cmpi ne, %1, %c0_i32_0 : i32
    scf.if %2 {
      %cst_45 = arith.constant 0.000000e+00 : f32
      %127 = vector.broadcast %cst_45 : f32 to vector<8x128xf32>
      %c0_46 = arith.constant 0 : index
      %c0_47 = arith.constant 0 : index
      %128 = vector.load %arg9[%c0_46, %c0_47] : memref<8x128xf32, #tpu.memory_space<vmem>>, vector<8x128xf32>
      tpu.vector_store %arg9[%c0_46, %c0_47], %127 {strides = array<i32>} : memref<8x128xf32, #tpu.memory_space<vmem>>, vector<8x128xf32>,
      %cst_48 = arith.constant 0.000000e+00 : f32
      %129 = vector.broadcast %cst_48 : f32 to vector<8x128xf32>
      %c0_49 = arith.constant 0 : index
      %c0_50 = arith.constant 0 : index
      %130 = vector.load %arg10[%c0_49, %c0_50] : memref<8x128xf32, #tpu.memory_space<vmem>>, vector<8x128xf32>
      tpu.vector_store %arg10[%c0_49, %c0_50], %129 {strides = array<i32>} : memref<8x128xf32, #tpu.memory_space<vmem>>, vector<8x128xf32>,
      %c0_i32_51 = arith.constant 0 : i32
      %131 = tpu.memref_slice %arg17[%c0_i32_51] : memref<5x!tpu.dma_semaphore, #tpu.memory_space<semaphore_mem>> -> memref<1x!tpu.dma_semaphore, #tpu.memory_space<semaphore_mem>>
      %132 = tpu.memref_squeeze %131 : memref<1x!tpu.dma_semaphore, #tpu.memory_space<semaphore_mem>> -> memref<!tpu.dma_semaphore, #tpu.memory_space<semaphore_mem>>
      tpu.enqueue_dma source(%arg3 : memref<16x512xf32, #tpu.memory_space<any>>) target(%arg12 : memref<16x512xf32, #tpu.memory_space<vmem>>) target_semaphore(%132 : memref<!tpu.dma_semaphore, #tpu.memory_space<semaphore_mem>>)
      %c1_i32_52 = arith.constant 1 : i32
      %133 = tpu.memref_slice %arg17[%c1_i32_52] : memref<5x!tpu.dma_semaphore, #tpu.memory_space<semaphore_mem>> -> memref<1x!tpu.dma_semaphore, #tpu.memory_space<semaphore_mem>>
      %134 = tpu.memref_squeeze %133 : memref<1x!tpu.dma_semaphore, #tpu.memory_space<semaphore_mem>> -> memref<!tpu.dma_semaphore, #tpu.memory_space<semaphore_mem>>
      tpu.enqueue_dma source(%arg4 : memref<128x512xf32, #tpu.memory_space<any>>) target(%arg13 : memref<128x512xf32, #tpu.memory_space<vmem>>) target_semaphore(%134 : memref<!tpu.dma_semaphore, #tpu.memory_space<semaphore_mem>>)
      %c2_i32_53 = arith.constant 2 : i32
      %135 = tpu.memref_slice %arg17[%c2_i32_53] : memref<5x!tpu.dma_semaphore, #tpu.memory_space<semaphore_mem>> -> memref<1x!tpu.dma_semaphore, #tpu.memory_space<semaphore_mem>>
      %136 = tpu.memref_squeeze %135 : memref<1x!tpu.dma_semaphore, #tpu.memory_space<semaphore_mem>> -> memref<!tpu.dma_semaphore, #tpu.memory_space<semaphore_mem>>
      tpu.enqueue_dma source(%arg5 : memref<1x512xf32, #tpu.memory_space<any>>) target(%arg14 : memref<1x512xf32, #tpu.memory_space<vmem>>) target_semaphore(%136 : memref<!tpu.dma_semaphore, #tpu.memory_space<semaphore_mem>>)
      %c3_i32_54 = arith.constant 3 : i32
      %137 = tpu.memref_slice %arg17[%c3_i32_54] : memref<5x!tpu.dma_semaphore, #tpu.memory_space<semaphore_mem>> -> memref<1x!tpu.dma_semaphore, #tpu.memory_space<semaphore_mem>>
      %138 = tpu.memref_squeeze %137 : memref<1x!tpu.dma_semaphore, #tpu.memory_space<semaphore_mem>> -> memref<!tpu.dma_semaphore, #tpu.memory_space<semaphore_mem>>
      tpu.enqueue_dma source(%arg6 : memref<128x128xf32, #tpu.memory_space<any>>) target(%arg15 : memref<128x128xf32, #tpu.memory_space<vmem>>) target_semaphore(%138 : memref<!tpu.dma_semaphore, #tpu.memory_space<semaphore_mem>>)
      %c4_i32 = arith.constant 4 : i32
      %139 = tpu.memref_slice %arg17[%c4_i32] : memref<5x!tpu.dma_semaphore, #tpu.memory_space<semaphore_mem>> -> memref<1x!tpu.dma_semaphore, #tpu.memory_space<semaphore_mem>>
      %140 = tpu.memref_squeeze %139 : memref<1x!tpu.dma_semaphore, #tpu.memory_space<semaphore_mem>> -> memref<!tpu.dma_semaphore, #tpu.memory_space<semaphore_mem>>
      tpu.enqueue_dma source(%arg7 : memref<1x128xf32, #tpu.memory_space<any>>) target(%arg16 : memref<1x128xf32, #tpu.memory_space<vmem>>) target_semaphore(%140 : memref<!tpu.dma_semaphore, #tpu.memory_space<semaphore_mem>>)
      %c0_i32_55 = arith.constant 0 : i32
      %141 = tpu.memref_slice %arg17[%c0_i32_55] : memref<5x!tpu.dma_semaphore, #tpu.memory_space<semaphore_mem>> -> memref<1x!tpu.dma_semaphore, #tpu.memory_space<semaphore_mem>>
      %142 = tpu.memref_squeeze %141 : memref<1x!tpu.dma_semaphore, #tpu.memory_space<semaphore_mem>> -> memref<!tpu.dma_semaphore, #tpu.memory_space<semaphore_mem>>
      tpu.wait_dma2 semaphore(%142 : memref<!tpu.dma_semaphore, #tpu.memory_space<semaphore_mem>>) src(%arg3 : memref<16x512xf32, #tpu.memory_space<any>>) dst(%arg12 : memref<16x512xf32, #tpu.memory_space<vmem>>)
      %c1_i32_56 = arith.constant 1 : i32
      %143 = tpu.memref_slice %arg17[%c1_i32_56] : memref<5x!tpu.dma_semaphore, #tpu.memory_space<semaphore_mem>> -> memref<1x!tpu.dma_semaphore, #tpu.memory_space<semaphore_mem>>
      %144 = tpu.memref_squeeze %143 : memref<1x!tpu.dma_semaphore, #tpu.memory_space<semaphore_mem>> -> memref<!tpu.dma_semaphore, #tpu.memory_space<semaphore_mem>>
      tpu.wait_dma2 semaphore(%144 : memref<!tpu.dma_semaphore, #tpu.memory_space<semaphore_mem>>) src(%arg4 : memref<128x512xf32, #tpu.memory_space<any>>) dst(%arg13 : memref<128x512xf32, #tpu.memory_space<vmem>>)
      %c2_i32_57 = arith.constant 2 : i32
      %145 = tpu.memref_slice %arg17[%c2_i32_57] : memref<5x!tpu.dma_semaphore, #tpu.memory_space<semaphore_mem>> -> memref<1x!tpu.dma_semaphore, #tpu.memory_space<semaphore_mem>>
      %146 = tpu.memref_squeeze %145 : memref<1x!tpu.dma_semaphore, #tpu.memory_space<semaphore_mem>> -> memref<!tpu.dma_semaphore, #tpu.memory_space<semaphore_mem>>
      tpu.wait_dma2 semaphore(%146 : memref<!tpu.dma_semaphore, #tpu.memory_space<semaphore_mem>>) src(%arg5 : memref<1x512xf32, #tpu.memory_space<any>>) dst(%arg14 : memref<1x512xf32, #tpu.memory_space<vmem>>)
      %c3_i32_58 = arith.constant 3 : i32
      %147 = tpu.memref_slice %arg17[%c3_i32_58] : memref<5x!tpu.dma_semaphore, #tpu.memory_space<semaphore_mem>> -> memref<1x!tpu.dma_semaphore, #tpu.memory_space<semaphore_mem>>
      %148 = tpu.memref_squeeze %147 : memref<1x!tpu.dma_semaphore, #tpu.memory_space<semaphore_mem>> -> memref<!tpu.dma_semaphore, #tpu.memory_space<semaphore_mem>>
      tpu.wait_dma2 semaphore(%148 : memref<!tpu.dma_semaphore, #tpu.memory_space<semaphore_mem>>) src(%arg6 : memref<128x128xf32, #tpu.memory_space<any>>) dst(%arg15 : memref<128x128xf32, #tpu.memory_space<vmem>>)
      %c4_i32_59 = arith.constant 4 : i32
      %149 = tpu.memref_slice %arg17[%c4_i32_59] : memref<5x!tpu.dma_semaphore, #tpu.memory_space<semaphore_mem>> -> memref<1x!tpu.dma_semaphore, #tpu.memory_space<semaphore_mem>>
      %150 = tpu.memref_squeeze %149 : memref<1x!tpu.dma_semaphore, #tpu.memory_space<semaphore_mem>> -> memref<!tpu.dma_semaphore, #tpu.memory_space<semaphore_mem>>
      tpu.wait_dma2 semaphore(%150 : memref<!tpu.dma_semaphore, #tpu.memory_space<semaphore_mem>>) src(%arg7 : memref<1x128xf32, #tpu.memory_space<any>>) dst(%arg16 : memref<1x128xf32, #tpu.memory_space<vmem>>)
    } else {
    }
    %c0 = arith.constant 0 : index
    %c0_1 = arith.constant 0 : index
    %c0_2 = arith.constant 0 : index
    %3 = vector.load %arg2[%c0, %c0_1, %c0_2] : memref<3x8x16xf32, #tpu.memory_space<vmem>>, vector<3x8x16xf32>
    %4 = vector.shape_cast %3 : vector<3x8x16xf32> to vector<24x16xf32>
    %c0_3 = arith.constant 0 : index
    %c0_4 = arith.constant 0 : index
    %5 = vector.load %arg12[%c0_3, %c0_4] : memref<16x512xf32, #tpu.memory_space<vmem>>, vector<16x512xf32>
    %cst = arith.constant dense<0.000000e+00> : vector<24x512xf32>
    %6 = tpu.matmul %4, %5, %cst {dimension_numbers = #tpu.dot_dimension_numbers<[1], [0], [0], [1], [0, 0, 1, 1], [], []>} : vector<24x16xf32>, vector<16x512xf32>, vector<24x512xf32> -> vector<24x512xf32>
    %c0_5 = arith.constant 0 : index
    %c0_6 = arith.constant 0 : index
    %7 = vector.load %arg14[%c0_5, %c0_6] : memref<1x512xf32, #tpu.memory_space<vmem>>, vector<1x512xf32>
    %8 = vector.broadcast %7 : vector<1x512xf32> to vector<24x512xf32>
    %9 = arith.addf %6, %8 : vector<24x512xf32>
    %c0_7 = arith.constant 0 : index
    %c0_8 = arith.constant 0 : index
    %10 = vector.load %arg11[%c0_7, %c0_8] : memref<24x512xf32, #tpu.memory_space<vmem>>, vector<24x512xf32>
    tpu.vector_store %arg11[%c0_7, %c0_8], %9 {strides = array<i32>} : memref<24x512xf32, #tpu.memory_space<vmem>>, vector<24x512xf32>,
    %c0_9 = arith.constant 0 : index
    %c0_10 = arith.constant 0 : index
    %11 = vector.load %arg13[%c0_9, %c0_10] : memref<128x512xf32, #tpu.memory_space<vmem>>, vector<128x512xf32>
    %c0_11 = arith.constant 0 : index
    %c0_12 = arith.constant 0 : index
    %12 = vector.load %arg9[%c0_11, %c0_12] : memref<8x128xf32, #tpu.memory_space<vmem>>, vector<8x128xf32>
    %c0_13 = arith.constant 0 : index
    %c0_14 = arith.constant 0 : index
    %13 = vector.load %arg10[%c0_13, %c0_14] : memref<8x128xf32, #tpu.memory_space<vmem>>, vector<8x128xf32>
    %c0_i32_15 = arith.constant 0 : i32
    %c8_i32 = arith.constant 8 : i32
    %14 = arith.muli %c0_i32_15, %c8_i32 : i32
    %15 = tpu.assume_multiple %14, 8 : i32
    %16 = arith.index_cast %15 : i32 to index
    %c0_16 = arith.constant 0 : index
    %17 = vector.load %arg11[%16, %c0_16] : memref<24x512xf32, #tpu.memory_space<vmem>>, vector<8x512xf32>
    %cst_17 = arith.constant dense<0.000000e+00> : vector<8x512xf32>
    %18 = tpu.matmul %12, %11, %cst_17 {dimension_numbers = #tpu.dot_dimension_numbers<[1], [0], [0], [1], [0, 0, 1, 1], [], []>} : vector<8x128xf32>, vector<128x512xf32>, vector<8x512xf32> -> vector<8x512xf32>
    %19 = arith.addf %17, %18 : vector<8x512xf32>
    %20 = vector.extract_strided_slice %19 {offsets = [0, 0], sizes = [8, 128], strides = [1, 1]} : vector<8x512xf32> to vector<8x128xf32>
    %21 = arith.negf %20 : vector<8x128xf32>
    %22 = math.exp %21 : vector<8x128xf32>
    %cst_18 = arith.constant 1.000000e+00 : f32
    %23 = vector.broadcast %cst_18 : f32 to vector<8x128xf32>
    %24 = arith.addf %23, %22 : vector<8x128xf32>
    %25 = arith.divf %23, %24 : vector<8x128xf32>
    %26 = vector.extract_strided_slice %19 {offsets = [0, 128], sizes = [8, 128], strides = [1, 1]} : vector<8x512xf32> to vector<8x128xf32>
    %27 = arith.negf %26 : vector<8x128xf32>
    %28 = math.exp %27 : vector<8x128xf32>
    %cst_19 = arith.constant 1.000000e+00 : f32
    %29 = vector.broadcast %cst_19 : f32 to vector<8x128xf32>
    %30 = arith.addf %29, %28 : vector<8x128xf32>
    %31 = arith.divf %29, %30 : vector<8x128xf32>
    %32 = vector.extract_strided_slice %19 {offsets = [0, 256], sizes = [8, 128], strides = [1, 1]} : vector<8x512xf32> to vector<8x128xf32>
    %33 = math.tanh %32 : vector<8x128xf32>
    %34 = vector.extract_strided_slice %19 {offsets = [0, 384], sizes = [8, 128], strides = [1, 1]} : vector<8x512xf32> to vector<8x128xf32>
    %35 = arith.negf %34 : vector<8x128xf32>
    %36 = math.exp %35 : vector<8x128xf32>
    %cst_20 = arith.constant 1.000000e+00 : f32
    %37 = vector.broadcast %cst_20 : f32 to vector<8x128xf32>
    %38 = arith.addf %37, %36 : vector<8x128xf32>
    %39 = arith.divf %37, %38 : vector<8x128xf32>
    %40 = arith.mulf %31, %13 : vector<8x128xf32>
    %41 = arith.mulf %25, %33 : vector<8x128xf32>
    %42 = arith.addf %40, %41 : vector<8x128xf32>
    %43 = math.tanh %42 : vector<8x128xf32>
    %44 = arith.mulf %39, %43 : vector<8x128xf32>
    %c3_i32 = arith.constant 3 : i32
    %45 = arith.muli %arg1, %c3_i32 : i32
    %46 = arith.addi %45, %c0_i32_15 : i32
    %c8_i32_21 = arith.constant 8 : i32
    %47 = arith.cmpi slt, %46, %c8_i32_21 : i32
    %48 = arith.select %47, %42, %13 : vector<8x128xf32>
    %49 = arith.select %47, %44, %12 : vector<8x128xf32>
    %c1_i32 = arith.constant 1 : i32
    %c8_i32_22 = arith.constant 8 : i32
    %50 = arith.muli %c1_i32, %c8_i32_22 : i32
    %51 = tpu.assume_multiple %50, 8 : i32
    %52 = arith.index_cast %51 : i32 to index
    %c0_23 = arith.constant 0 : index
    %53 = vector.load %arg11[%52, %c0_23] : memref<24x512xf32, #tpu.memory_space<vmem>>, vector<8x512xf32>
    %cst_24 = arith.constant dense<0.000000e+00> : vector<8x512xf32>
    %54 = tpu.matmul %49, %11, %cst_24 {dimension_numbers = #tpu.dot_dimension_numbers<[1], [0], [0], [1], [0, 0, 1, 1], [], []>} : vector<8x128xf32>, vector<128x512xf32>, vector<8x512xf32> -> vector<8x512xf32>
    %55 = arith.addf %53, %54 : vector<8x512xf32>
    %56 = vector.extract_strided_slice %55 {offsets = [0, 0], sizes = [8, 128], strides = [1, 1]} : vector<8x512xf32> to vector<8x128xf32>
    %57 = arith.negf %56 : vector<8x128xf32>
    %58 = math.exp %57 : vector<8x128xf32>
    %cst_25 = arith.constant 1.000000e+00 : f32
    %59 = vector.broadcast %cst_25 : f32 to vector<8x128xf32>
    %60 = arith.addf %59, %58 : vector<8x128xf32>
    %61 = arith.divf %59, %60 : vector<8x128xf32>
    %62 = vector.extract_strided_slice %55 {offsets = [0, 128], sizes = [8, 128], strides = [1, 1]} : vector<8x512xf32> to vector<8x128xf32>
    %63 = arith.negf %62 : vector<8x128xf32>
    %64 = math.exp %63 : vector<8x128xf32>
    %cst_26 = arith.constant 1.000000e+00 : f32
    %65 = vector.broadcast %cst_26 : f32 to vector<8x128xf32>
    %66 = arith.addf %65, %64 : vector<8x128xf32>
    %67 = arith.divf %65, %66 : vector<8x128xf32>
    %68 = vector.extract_strided_slice %55 {offsets = [0, 256], sizes = [8, 128], strides = [1, 1]} : vector<8x512xf32> to vector<8x128xf32>
    %69 = math.tanh %68 : vector<8x128xf32>
    %70 = vector.extract_strided_slice %55 {offsets = [0, 384], sizes = [8, 128], strides = [1, 1]} : vector<8x512xf32> to vector<8x128xf32>
    %71 = arith.negf %70 : vector<8x128xf32>
    %72 = math.exp %71 : vector<8x128xf32>
    %cst_27 = arith.constant 1.000000e+00 : f32
    %73 = vector.broadcast %cst_27 : f32 to vector<8x128xf32>
    %74 = arith.addf %73, %72 : vector<8x128xf32>
    %75 = arith.divf %73, %74 : vector<8x128xf32>
    %76 = arith.mulf %67, %48 : vector<8x128xf32>
    %77 = arith.mulf %61, %69 : vector<8x128xf32>
    %78 = arith.addf %76, %77 : vector<8x128xf32>
    %79 = math.tanh %78 : vector<8x128xf32>
    %80 = arith.mulf %75, %79 : vector<8x128xf32>
    %c3_i32_28 = arith.constant 3 : i32
    %81 = arith.muli %arg1, %c3_i32_28 : i32
    %82 = arith.addi %81, %c1_i32 : i32
    %c8_i32_29 = arith.constant 8 : i32
    %83 = arith.cmpi slt, %82, %c8_i32_29 : i32
    %84 = arith.select %83, %78, %48 : vector<8x128xf32>
    %85 = arith.select %83, %80, %49 : vector<8x128xf32>
    %c2_i32 = arith.constant 2 : i32
    %c8_i32_30 = arith.constant 8 : i32
    %86 = arith.muli %c2_i32, %c8_i32_30 : i32
    %87 = tpu.assume_multiple %86, 8 : i32
    %88 = arith.index_cast %87 : i32 to index
    %c0_31 = arith.constant 0 : index
    %89 = vector.load %arg11[%88, %c0_31] : memref<24x512xf32, #tpu.memory_space<vmem>>, vector<8x512xf32>
    %cst_32 = arith.constant dense<0.000000e+00> : vector<8x512xf32>
    %90 = tpu.matmul %85, %11, %cst_32 {dimension_numbers = #tpu.dot_dimension_numbers<[1], [0], [0], [1], [0, 0, 1, 1], [], []>} : vector<8x128xf32>, vector<128x512xf32>, vector<8x512xf32> -> vector<8x512xf32>
    %91 = arith.addf %89, %90 : vector<8x512xf32>
    %92 = vector.extract_strided_slice %91 {offsets = [0, 0], sizes = [8, 128], strides = [1, 1]} : vector<8x512xf32> to vector<8x128xf32>
    %93 = arith.negf %92 : vector<8x128xf32>
    %94 = math.exp %93 : vector<8x128xf32>
    %cst_33 = arith.constant 1.000000e+00 : f32
    %95 = vector.broadcast %cst_33 : f32 to vector<8x128xf32>
    %96 = arith.addf %95, %94 : vector<8x128xf32>
    %97 = arith.divf %95, %96 : vector<8x128xf32>
    %98 = vector.extract_strided_slice %91 {offsets = [0, 128], sizes = [8, 128], strides = [1, 1]} : vector<8x512xf32> to vector<8x128xf32>
    %99 = arith.negf %98 : vector<8x128xf32>
    %100 = math.exp %99 : vector<8x128xf32>
    %cst_34 = arith.constant 1.000000e+00 : f32
    %101 = vector.broadcast %cst_34 : f32 to vector<8x128xf32>
    %102 = arith.addf %101, %100 : vector<8x128xf32>
    %103 = arith.divf %101, %102 : vector<8x128xf32>
    %104 = vector.extract_strided_slice %91 {offsets = [0, 256], sizes = [8, 128], strides = [1, 1]} : vector<8x512xf32> to vector<8x128xf32>
    %105 = math.tanh %104 : vector<8x128xf32>
    %106 = vector.extract_strided_slice %91 {offsets = [0, 384], sizes = [8, 128], strides = [1, 1]} : vector<8x512xf32> to vector<8x128xf32>
    %107 = arith.negf %106 : vector<8x128xf32>
    %108 = math.exp %107 : vector<8x128xf32>
    %cst_35 = arith.constant 1.000000e+00 : f32
    %109 = vector.broadcast %cst_35 : f32 to vector<8x128xf32>
    %110 = arith.addf %109, %108 : vector<8x128xf32>
    %111 = arith.divf %109, %110 : vector<8x128xf32>
    %112 = arith.mulf %103, %84 : vector<8x128xf32>
    %113 = arith.mulf %97, %105 : vector<8x128xf32>
    %114 = arith.addf %112, %113 : vector<8x128xf32>
    %115 = math.tanh %114 : vector<8x128xf32>
    %116 = arith.mulf %111, %115 : vector<8x128xf32>
    %c3_i32_36 = arith.constant 3 : i32
    %117 = arith.muli %arg1, %c3_i32_36 : i32
    %118 = arith.addi %117, %c2_i32 : i32
    %c8_i32_37 = arith.constant 8 : i32
    %119 = arith.cmpi slt, %118, %c8_i32_37 : i32
    %120 = arith.select %119, %114, %84 : vector<8x128xf32>
    %121 = arith.select %119, %116, %85 : vector<8x128xf32>
    %c3_i32_38 = arith.constant 3 : i32
    %c0_39 = arith.constant 0 : index
    %c0_40 = arith.constant 0 : index
    %122 = vector.load %arg9[%c0_39, %c0_40] : memref<8x128xf32, #tpu.memory_space<vmem>>, vector<8x128xf32>
    tpu.vector_store %arg9[%c0_39, %c0_40], %121 {strides = array<i32>} : memref<8x128xf32, #tpu.memory_space<vmem>>, vector<8x128xf32>,
    %c0_41 = arith.constant 0 : index
    %c0_42 = arith.constant 0 : index
    %123 = vector.load %arg10[%c0_41, %c0_42] : memref<8x128xf32, #tpu.memory_space<vmem>>, vector<8x128xf32>
    tpu.vector_store %arg10[%c0_41, %c0_42], %120 {strides = array<i32>} : memref<8x128xf32, #tpu.memory_space<vmem>>, vector<8x128xf32>,
    %c2_i32_43 = arith.constant 2 : i32
    %124 = arith.cmpi eq, %arg1, %c2_i32_43 : i32
    %125 = arith.extui %124 : i1 to i32
    %c0_i32_44 = arith.constant 0 : i32
    %126 = arith.cmpi ne, %125, %c0_i32_44 : i32
    scf.if %126 {
      %c0_45 = arith.constant 0 : index
      %c0_46 = arith.constant 0 : index
      %127 = vector.load %arg15[%c0_45, %c0_46] : memref<128x128xf32, #tpu.memory_space<vmem>>, vector<128x128xf32>
      %cst_47 = arith.constant dense<0.000000e+00> : vector<8x128xf32>
      %128 = tpu.matmul %121, %127, %cst_47 {dimension_numbers = #tpu.dot_dimension_numbers<[1], [0], [0], [1], [0, 0, 1, 1], [], []>} : vector<8x128xf32>, vector<128x128xf32>, vector<8x128xf32> -> vector<8x128xf32>
      %c0_48 = arith.constant 0 : index
      %c0_49 = arith.constant 0 : index
      %129 = vector.load %arg16[%c0_48, %c0_49] : memref<1x128xf32, #tpu.memory_space<vmem>>, vector<1x128xf32>
      %130 = vector.broadcast %129 : vector<1x128xf32> to vector<8x128xf32>
      %131 = arith.addf %128, %130 : vector<8x128xf32>
      %132 = tpu.iota {dimensions = array<i32: 1>} : vector<8x128xi32>
      %c4_i32 = arith.constant 4 : i32
      %133 = vector.broadcast %c4_i32 : i32 to vector<8x128xi32>
      %134 = arith.cmpi slt, %132, %133 : vector<8x128xi32>
      %cst_50 = arith.constant -1.000000e+30 : f32
      %135 = vector.broadcast %cst_50 : f32 to vector<8x128xf32>
      %136 = arith.select %134, %131, %135 : vector<8x128xi1>, vector<8x128xf32>
      %cst_51 = arith.constant dense<0xFF800000> : vector<8xf32>
      %137 = vector.multi_reduction <maximumf>, %136, %cst_51 [1] : vector<8x128xf32> to vector<8xf32>
      %138 = vector.shape_cast %137 : vector<8xf32> to vector<8x1xf32>
      %139 = vector.broadcast %138 : vector<8x1xf32> to vector<8x128xf32>
      %140 = arith.subf %136, %139 : vector<8x128xf32>
      %141 = math.exp %140 : vector<8x128xf32>
      %cst_52 = arith.constant dense<0.000000e+00> : vector<8xf32>
      %142 = vector.multi_reduction <add>, %141, %cst_52 [1] : vector<8x128xf32> to vector<8xf32>
      %143 = vector.shape_cast %142 : vector<8xf32> to vector<8x1xf32>
      %144 = vector.broadcast %143 : vector<8x1xf32> to vector<8x128xf32>
      %145 = arith.divf %141, %144 : vector<8x128xf32>
      %c0_53 = arith.constant 0 : index
      %c0_54 = arith.constant 0 : index
      %146 = vector.load %arg8[%c0_53, %c0_54] : memref<8x128xf32, #tpu.memory_space<vmem>>, vector<8x128xf32>
      tpu.vector_store %arg8[%c0_53, %c0_54], %145 {strides = array<i32>} : memref<8x128xf32, #tpu.memory_space<vmem>>, vector<8x128xf32>,
    } else {
    }
    return
  }
  func.func @transform_0(%arg0: i32, %arg1: i32) -> (i32, i32, i32) {
    %c0_i32 = arith.constant 0 : i32
    %c0_i32_0 = arith.constant 0 : i32
    return %arg1, %arg0, %c0_i32 : i32, i32, i32
  }
  func.func @transform_6(%arg0: i32, %arg1: i32) -> (i32, i32) {
    %c0_i32 = arith.constant 0 : i32
    %c0_i32_0 = arith.constant 0 : i32
    return %arg0, %c0_i32 : i32, i32
  }
}

</mosaic_0001>

<llo_original>
// kernel: tpu_custom_call.1
$region0: #{tpu_custom_call.1}
  #allocation0 [shape = 'u32[]', space=smem, size = 0x4, offset = 0x4, fixed_abs, tag = 'smem constant byte address 0x4 - core index']
  #allocation1 [shape = 'u32[144,128]{1,0:T(1,128)}', space=vmem, size = 0x12000, scoped, tag = 'internal scratch']
  #allocation2 [shape = 'f32[8,128]{1,0:T(8,128)}', space=vmem, size = 0x1000, scoped, tag = 'scratch operand']
  #allocation3 [shape = 'f32[8,128]{1,0:T(8,128)}', space=vmem, size = 0x1000, scoped, tag = 'scratch operand']
  #allocation4 [shape = 'f32[24,512]{1,0:T(8,128)}', space=vmem, size = 0xc000, scoped, tag = 'scratch operand']
  #allocation5 [shape = 'f32[16,512]{1,0:T(8,128)}', space=vmem, size = 0x8000, scoped, tag = 'scratch operand']
  #allocation6 [shape = 'f32[128,512]{1,0:T(8,128)}', space=vmem, size = 0x40000, scoped, tag = 'scratch operand']
  #allocation7 [shape = 'f32[1,512]{1,0:T(1,128)}', space=vmem, size = 0x800, scoped, tag = 'scratch operand']
  #allocation8 [shape = 'f32[128,128]{1,0:T(8,128)}', space=vmem, size = 0x10000, scoped, tag = 'scratch operand']
  #allocation9 [shape = 'f32[1,128]{1,0:T(1,128)}', space=vmem, size = 0x200, scoped, tag = 'scratch operand']
  #allocation10 [shape = 's32[5]{0}', space=sflag, size = 0x14, scoped, tag = 'scratch operand']
  #allocation15 [shape = 's32[]', space=sflag, size = 0x4, offset = 0, fixed_abs, tag = 'sflag constant byte address 0x0 - dummy sync flag']
  #allocation16 [shape = 's32[]', space=sflag, size = 0x4, offset = 0, fixed_abs, tag = 'sflag constant byte address 0x0 - dummy sync flag']
  #allocation17 [shape = 'u32[]', space=smem, size = 0x4, offset = 0x44, fixed_abs, tag = 'smem constant byte address 0x44 - assertion arg 0']
  #allocation18 [shape = 'u32[]', space=smem, size = 0x4, offset = 0x48, fixed_abs, tag = 'smem constant byte address 0x48 - assertion arg 1']
  #allocation19 [shape = 's32[]', space=sflag, size = 0x4, offset = 0, fixed_abs, tag = 'sflag constant byte address 0x0 - dummy sync flag']
  #allocation20 [shape = 's32[]', space=sflag, size = 0x4, offset = 0, fixed_abs, tag = 'sflag constant byte address 0x0 - dummy sync flag']
  #allocation21 [shape = 's32[]', space=sflag, size = 0x4, offset = 0, fixed_abs, tag = 'sflag constant byte address 0x0 - dummy sync flag']
  #allocation22 [shape = 's32[]', space=sflag, size = 0x4, offset = 0, fixed_abs, tag = 'sflag constant byte address 0x0 - dummy sync flag']
  #allocation23 [shape = 's32[]', space=sflag, size = 0x4, offset = 0, fixed_abs, tag = 'sflag constant byte address 0x0 - dummy sync flag']
  #allocation24 [shape = 's32[]', space=sflag, size = 0x4, offset = 0, fixed_abs, tag = 'sflag constant byte address 0x0 - dummy sync flag']
  %s0 = inlined_call_operand.hbm [shape: f32[9,8,16], index: 0, kind: input, shape index: {}]
  %s1 = inlined_call_operand.hbm [shape: f32[16,512], index: 1, kind: input, shape index: {}]
  %s2 = inlined_call_operand.hbm [shape: f32[128,512], index: 2, kind: input, shape index: {}]
  %s3 = inlined_call_operand.vmem [shape: f32[1,512], index: 3, kind: input, shape index: {}]
  %s4 = inlined_call_operand.hbm [shape: f32[128,128], index: 4, kind: input, shape index: {}]
  %s5 = inlined_call_operand.vmem [shape: f32[1,128], index: 5, kind: input, shape index: {}]
  %s6 = inlined_call_operand.hbm [shape: f32[8,128], index: 6, kind: output, shape index: {}]
  %s7 = sld [smem:[#allocation0]]
  $region121: #{tpu_custom_call.1} parent=0
    _
  %s9 = ssub.s32 1, %s7
  %s10 = scalar_select 0, %s9, %s7
  $region1: #{tpu_custom_call.1} parent=0
    #allocation11 [shape = 'u8[24576]{0}', space=vmem, size = 0x6000, scoped, tag = 'input window, operand 0']
    #allocation12 [shape = 's32[2]{0}', space=sflag, size = 0x8, scoped, tag = 'scoped memory for tpu_custom_call.1']
    #allocation13 [shape = 's32[2]{0}', space=sflag, size = 0x8, scoped, tag = 'scoped memory for tpu_custom_call.1']
    #allocation14 [shape = 'u8[4096]{0}', space=vmem, size = 0x1000, scoped, tag = 'output window, operand 0, single buffered']
    %11 = vsyncpa [#allocation12], 0
    %s12 = scalar_lea.sflag [#allocation12], 1
    %13 = vsyncpa %s12, 0
    %14 = vsyncpa [#allocation13], 0
    loop: start=0, step=1, limit=5
    $region2: #{tpu_custom_call.1} parent=1 // loop_pre_header
      _
    $region3: #{tpu_custom_call.1} parent=1 // loop_header
      %s16 = sphi 0, %s20
      %p17 = scmp.ge.s32.totalorder %s16, 5
      %s23 = sphi 0, %s35
      %s24 = sphi 0, %s31
      %s25 = sphi 0, %s23
      %s26 = sphi 0, %s24
      %s27 = sphi 0, %s25
      %s28 = sphi 0, %s26
      %s40 = sphi 0, %s42
      %s43 = sphi 0, %s40
      %s44 = sphi 0, %s43
      %s60 = sphi 0, %s44
      %s66 = sphi 0, %s68
      %s69 = sphi 0, %s66
      %s70 = sphi 0, %s69
      %s86 = sphi 0, %s70
    $region4: #{tpu_custom_call.1} parent=1 // loop_header_branch
      %19 = sbr.rel (%p17) target = $region8
    $region5: #{tpu_custom_call.1} parent=1 // loop_body
      %s21 = ssub.s32 %s16, 1
      %s22 = ssub.s32 %s16, 2
      %s29 = sadd.s32 1, %s24
      %p30 = scmp.ge.s32.totalorder %s29, 3
      %s31 = scalar_select %p30, 0, %s29
      %s32 = sadd.s32 1, %s23
      %s33 = scalar_select %p30, %s32, %s23
      %p34 = scmp.ge.s32.totalorder %s33, 1
      %s35 = scalar_select %p34, 0, %s33
      %s36 = ssub.s32 %s24, %s31
      %s37 = ssub.s32 %s23, %s35
      %s38 = sor.u32 %s36, %s37
      %p39 = scmp.eq.s32.totalorder %s38, 0
      %s41 = sadd.s32 %s40, 1
      %s42 = scalar_select %p39, %s40, %s41
      %p45 = pneg %p39
      %p46 = scmp.eq.s32.totalorder %s16, 2
      %p47 = por %p45, %p46
      %p48 = scmp.ne.s32.totalorder %s40, %s43
      %p49 = scmp.eq.s32.totalorder %s16, 0
      %p50 = por %p48, %p49
      %p51 = scmp.ne.s32.totalorder %s40, %s43
      %p52 = scmp.eq.s32.totalorder %s21, 2
      %p53 = por %p51, %p52
      %p54 = scmp.ne.s32.totalorder %s43, %s44
      %p55 = scmp.eq.s32.totalorder %s21, 0
      %p56 = por %p54, %p55
      %p57 = scmp.ne.s32.totalorder %s43, %s44
      %p58 = scmp.eq.s32.totalorder %s22, 2
      %p59 = por %p57, %p58
      %p61 = scmp.ne.s32.totalorder %s44, %s60
      %p62 = scmp.eq.s32.totalorder %s22, 0
      %p63 = por %p61, %p62
      %s64 = ssub.s32 %s23, %s35
      %p65 = scmp.eq.s32.totalorder %s64, 0
      %s67 = sadd.s32 %s66, 1
      %s68 = scalar_select %p65, %s66, %s67
      %p71 = pneg %p65
      %p72 = scmp.eq.s32.totalorder %s16, 2
      %p73 = por %p71, %p72
      %p74 = scmp.ne.s32.totalorder %s66, %s69
      %p75 = scmp.eq.s32.totalorder %s16, 0
      %p76 = por %p74, %p75
      %p77 = scmp.ne.s32.totalorder %s66, %s69
      %p78 = scmp.eq.s32.totalorder %s21, 2
      %p79 = por %p77, %p78
      %p80 = scmp.ne.s32.totalorder %s69, %s70
      %p81 = scmp.eq.s32.totalorder %s21, 0
      %p82 = por %p80, %p81
      %p83 = scmp.ne.s32.totalorder %s69, %s70
      %p84 = scmp.eq.s32.totalorder %s22, 2
      %p85 = por %p83, %p84
      %p87 = scmp.ne.s32.totalorder %s70, %s86
      %p88 = scmp.eq.s32.totalorder %s22, 0
      %p89 = por %p87, %p88
      %p90 = scmp.le.s32.totalorder 1, %s16
      %p91 = scmp.lt.s32.totalorder %s16, 4
      %p92 = pnand %p90, %p91
      %p93 = pneg %p92
      // Predicated region
      $region9: #{tpu_custom_call.1} parent=5 // pred_check
        _
      $region10: #{tpu_custom_call.1} parent=5 // pred_check_branch
        %95 = sbr.rel (%p92) target = $region12
      $region11: #{tpu_custom_call.1} parent=5 // pred_region
        %s96 = ssub.s32 %s16, 1
      $region12: #{tpu_custom_call.1} parent=5 // pred_fallthru
        _
      %p97 = scmp.lt.s32.totalorder %s16, 3
      // Predicated region
      $region13: #{tpu_custom_call.1} parent=5 // pred_check
        %p98 = pneg %p97
      $region14: #{tpu_custom_call.1} parent=5 // pred_check_branch
        %100 = sbr.rel (%p98) target = $region16
      $region15: #{tpu_custom_call.1} parent=5 // pred_region
        // Predicated region
        $region17: #{tpu_custom_call.1} parent=15 // pred_check
          %p101 = pneg %p50
        $region18: #{tpu_custom_call.1} parent=15 // pred_check_branch
          %103 = sbr.rel (%p101) target = $region20
        $region19: #{tpu_custom_call.1} parent=15 // pred_region
          %s104 = sand.u32 %s40, 1
          %s105 = scalar_lea.sflag [#allocation12], %s104
          %s106 = sand.u32 %s40, 1
          %s107 = smul.addr %s106, 24
          %s108 = scalar_lea.vmem [#allocation11], %s107
          %s109 = smul.u32 3, %s24
          %s111 = ssub.s32 384, 384
          %112 = vsyncadd %s105, %s111
          %s113 = sadd.s32 %s23, %s109
          %s114 = smul.addr %s113, 128
          %s115 = scalar_lea.hbm %s0, %s114
          %s116 = sshll.u32 %s108, 4
          %s117 = int_to_ptr.vmem [resolvable:$true] %s116
          %122 = dma.hbm_to_vmem [thread:$0]  %s115, 384, %s117, %s105, 128, 128, 8
        $region20: #{tpu_custom_call.1} parent=15 // pred_fallthru
          _
      $region16: #{tpu_custom_call.1} parent=5 // pred_fallthru
        _
      %p123 = scmp.le.s32.totalorder 1, %s16
      %p124 = scmp.lt.s32.totalorder %s16, 4
      %p125 = pnand %p123, %p124
      %p126 = pneg %p125
      // Predicated region
      $region21: #{tpu_custom_call.1} parent=5 // pred_check
        _
      $region22: #{tpu_custom_call.1} parent=5 // pred_check_branch
        %128 = sbr.rel (%p125) target = $region24
      $region23: #{tpu_custom_call.1} parent=5 // pred_region
        %s129 = ssub.s32 %s16, 1
        %s130 = sand.u32 %s43, 1
        %s131 = scalar_lea.sflag [#allocation12], %s130
        %s132 = sand.u32 %s43, 1
        %s133 = smul.addr %s132, 24
        %s134 = scalar_lea.vmem [#allocation11], %s133
        // Predicated region
        $region25: #{tpu_custom_call.1} parent=23 // pred_check
          %p135 = pneg %p56
        $region26: #{tpu_custom_call.1} parent=23 // pred_check_branch
          %137 = sbr.rel (%p135) target = $region28
        $region27: #{tpu_custom_call.1} parent=23 // pred_region
          %138 = dma.done %s131, 384
        $region28: #{tpu_custom_call.1} parent=23 // pred_fallthru
          _
        %s139 = sand.u32 %s43, 1
        %s140 = scalar_lea.sflag [#allocation12], %s139
        %s141 = sand.u32 %s43, 1
        %s142 = smul.addr %s141, 24
        %s143 = scalar_lea.vmem [#allocation11], %s142
        %p144 = pneg %p56
        %p145 = pneg %p53
        %p146 = pneg %p82
        %p147 = pneg %p79
        %s148 = smul.u32 3, %s26
        %p149 = scmp.eq.s32.totalorder %s26, 0
        // Predicated region
        $region29: #{tpu_custom_call.1} parent=23 // pred_check
          %p150 = pneg %p149
        $region30: #{tpu_custom_call.1} parent=23 // pred_check_branch
          %152 = sbr.rel (%p150) target = $region32
        $region31: #{tpu_custom_call.1} parent=23 // pred_region
          %153 = vst [vmem:[#allocation2] sm:$0xff] 0.0
          %154 = vst [vmem:[#allocation3] sm:$0xff] 0.0
          // Predicated region
          $region33: #{tpu_custom_call.1} parent=31 // pred_check
            _
          $region34: #{tpu_custom_call.1} parent=31 // pred_check_branch
            %156 = sbr.rel target = $region36
          $region35: #{tpu_custom_call.1} parent=31 // pred_region
            %157 = sst [smem:[#allocation17]] [#allocation16]
            %158 = sst [smem:[#allocation18]] [#allocation15]
          $region36: #{tpu_custom_call.1} parent=31 // pred_fallthru
            _
          %160 = shalt.err (0)
          %s162 = sshll.u32 [#allocation5], 4
          %s163 = int_to_ptr.vmem [resolvable:$true] %s162
          %165 = dma.hbm_to_vmem [thread:$0]  %s1, 1024, %s163, [#allocation10]
          %s166 = scalar_lea.sflag [#allocation10], 1
          // Predicated region
          $region37: #{tpu_custom_call.1} parent=31 // pred_check
            _
          $region38: #{tpu_custom_call.1} parent=31 // pred_check_branch
            %168 = sbr.rel target = $region40
          $region39: #{tpu_custom_call.1} parent=31 // pred_region
            %169 = sst [smem:[#allocation17]] [#allocation20]
            %170 = sst [smem:[#allocation18]] [#allocation19]
          $region40: #{tpu_custom_call.1} parent=31 // pred_fallthru
            _
          %172 = shalt.err (0)
          %s174 = sshll.u32 [#allocation6], 4
          %s175 = int_to_ptr.vmem [resolvable:$true] %s174
          %177 = dma.hbm_to_vmem [thread:$0]  %s2, 8192, %s175, %s166
          %s178 = scalar_lea.sflag [#allocation10], 2
          %p180 = scmp.lt.u32.totalorder 4, 8
          %p181 = pneg %p180
          // Predicated region
          $region41: #{tpu_custom_call.1} parent=31 // pred_check
            _
          $region42: #{tpu_custom_call.1} parent=31 // pred_check_branch
            %183 = sbr.rel (%p180) target = $region44
          $region43: #{tpu_custom_call.1} parent=31 // pred_region
            %s198 = sand.u32 4, 7
            %p199 = scmp.eq.s32.totalorder %s198, 0
            %p200 = pneg %p199
            // Predicated region
            $region56: #{tpu_custom_call.1} parent=43 // pred_check
              _
            $region57: #{tpu_custom_call.1} parent=43 // pred_check_branch
              %202 = sbr.rel (%p199) target = $region59
            $region58: #{tpu_custom_call.1} parent=43 // pred_region
              %s203 = sand.u32 4, 7
              %s204 = ssub.s32 4, %s203
              %s205 = scalar_lea.vmem %s3, %s204
              %s206 = ssub.s32 4, %s203
              %s207 = scalar_lea.vmem [#allocation7], %s206
              %s208 = sshllo.u32 0, %s203
              loop: start=0, step=1, limit=1
              $region60: #{tpu_custom_call.1} parent=58 // loop_pre_header
                _
              $region61: #{tpu_custom_call.1} parent=58 // loop_header
                %s210 = sphi 0, %s214
                %p211 = scmp.ge.s32.totalorder %s210, 1
                %s215 = sphi %s205, %s205
                %s216 = sphi %s207, %s207
              $region62: #{tpu_custom_call.1} parent=58 // loop_header_branch
                %213 = sbr.rel (%p211) target = $region66
              $region63: #{tpu_custom_call.1} parent=58 // loop_body
                %v217 = vld [vmem:[%s215] sm:%s208]
                %218 = vst [vmem:[%s216] sm:%s208] %v217
              $region64: #{tpu_custom_call.1} parent=58 // loop_footer
                %s214 = sadd.s32 1, %s210
              $region65: #{tpu_custom_call.1} parent=58 // loop_footer_branch
                %209 = sbr.rel target = $region61
              $region66: #{tpu_custom_call.1} parent=58 // loop_exit
                _
            $region59: #{tpu_custom_call.1} parent=43 // pred_fallthru
              _
          $region44: #{tpu_custom_call.1} parent=31 // pred_fallthru
            _
          // Predicated region
          $region45: #{tpu_custom_call.1} parent=31 // pred_check
            %p184 = pneg %p180
          $region46: #{tpu_custom_call.1} parent=31 // pred_check_branch
            %186 = sbr.rel (%p184) target = $region48
          $region47: #{tpu_custom_call.1} parent=31 // pred_region
            %s187 = sshllo.u32 0, 4
            loop: start=0, step=1, limit=1
            $region49: #{tpu_custom_call.1} parent=47 // loop_pre_header
              _
            $region50: #{tpu_custom_call.1} parent=47 // loop_header
              %s189 = sphi 0, %s193
              %p190 = scmp.ge.s32.totalorder %s189, 1
              %s194 = sphi %s3, %s3
              %s195 = sphi [#allocation7], [#allocation7]
            $region51: #{tpu_custom_call.1} parent=47 // loop_header_branch
              %192 = sbr.rel (%p190) target = $region55
            $region52: #{tpu_custom_call.1} parent=47 // loop_body
              %v196 = vld [vmem:[%s194] sm:%s187]
              %197 = vst [vmem:[%s195] sm:%s187] %v196
            $region53: #{tpu_custom_call.1} parent=47 // loop_footer
              %s193 = sadd.s32 1, %s189
            $region54: #{tpu_custom_call.1} parent=47 // loop_footer_branch
              %188 = sbr.rel target = $region50
            $region55: #{tpu_custom_call.1} parent=47 // loop_exit
              _
          $region48: #{tpu_custom_call.1} parent=31 // pred_fallthru
            _
          // Predicated region
          $region67: #{tpu_custom_call.1} parent=31 // pred_check
            _
          $region68: #{tpu_custom_call.1} parent=31 // pred_check_branch
            %221 = sbr.rel (0) target = $region70
          $region69: #{tpu_custom_call.1} parent=31 // pred_region
            %222 = vsyncadd %s178, 64
          $region70: #{tpu_custom_call.1} parent=31 // pred_fallthru
            _
          %s223 = scalar_lea.sflag [#allocation10], 3
          // Predicated region
          $region71: #{tpu_custom_call.1} parent=31 // pred_check
            _
          $region72: #{tpu_custom_call.1} parent=31 // pred_check_branch
            %225 = sbr.rel target = $region74
          $region73: #{tpu_custom_call.1} parent=31 // pred_region
            %226 = sst [smem:[#allocation17]] [#allocation23]
            %227 = sst [smem:[#allocation18]] [#allocation22]
          $region74: #{tpu_custom_call.1} parent=31 // pred_fallthru
            _
          %229 = shalt.err (0)
          %s231 = sshll.u32 [#allocation8], 4
          %s232 = int_to_ptr.vmem [resolvable:$true] %s231
          %234 = dma.hbm_to_vmem [thread:$0]  %s4, 2048, %s232, %s223
          %s235 = scalar_lea.sflag [#allocation10], 4
          %p237 = scmp.lt.u32.totalorder 1, 8
          %p238 = pneg %p237
          // Predicated region
          $region75: #{tpu_custom_call.1} parent=31 // pred_check
            _
          $region76: #{tpu_custom_call.1} parent=31 // pred_check_branch
            %240 = sbr.rel (%p237) target = $region78
          $region77: #{tpu_custom_call.1} parent=31 // pred_region
            %s255 = sand.u32 1, 7
            %p256 = scmp.eq.s32.totalorder %s255, 0
            %p257 = pneg %p256
            // Predicated region
            $region90: #{tpu_custom_call.1} parent=77 // pred_check
              _
            $region91: #{tpu_custom_call.1} parent=77 // pred_check_branch
              %259 = sbr.rel (%p256) target = $region93
            $region92: #{tpu_custom_call.1} parent=77 // pred_region
              %s260 = sand.u32 1, 7
              %s261 = ssub.s32 1, %s260
              %s262 = scalar_lea.vmem %s5, %s261
              %s263 = ssub.s32 1, %s260
              %s264 = scalar_lea.vmem [#allocation9], %s263
              %s265 = sshllo.u32 0, %s260
              loop: start=0, step=1, limit=1
              $region94: #{tpu_custom_call.1} parent=92 // loop_pre_header
                _
              $region95: #{tpu_custom_call.1} parent=92 // loop_header
                %s267 = sphi 0, %s271
                %p268 = scmp.ge.s32.totalorder %s267, 1
                %s272 = sphi %s262, %s262
                %s273 = sphi %s264, %s264
              $region96: #{tpu_custom_call.1} parent=92 // loop_header_branch
                %270 = sbr.rel (%p268) target = $region100
              $region97: #{tpu_custom_call.1} parent=92 // loop_body
                %v274 = vld [vmem:[%s272] sm:%s265]
                %275 = vst [vmem:[%s273] sm:%s265] %v274
              $region98: #{tpu_custom_call.1} parent=92 // loop_footer
                %s271 = sadd.s32 1, %s267
              $region99: #{tpu_custom_call.1} parent=92 // loop_footer_branch
                %266 = sbr.rel target = $region95
              $region100: #{tpu_custom_call.1} parent=92 // loop_exit
                _
            $region93: #{tpu_custom_call.1} parent=77 // pred_fallthru
              _
          $region78: #{tpu_custom_call.1} parent=31 // pred_fallthru
            _
          // Predicated region
          $region79: #{tpu_custom_call.1} parent=31 // pred_check
            %p241 = pneg %p237
          $region80: #{tpu_custom_call.1} parent=31 // pred_check_branch
            %243 = sbr.rel (%p241) target = $region82
          $region81: #{tpu_custom_call.1} parent=31 // pred_region
            %s244 = sshllo.u32 0, 1
            loop: start=0, step=1, limit=1
            $region83: #{tpu_custom_call.1} parent=81 // loop_pre_header
              _
            $region84: #{tpu_custom_call.1} parent=81 // loop_header
              %s246 = sphi 0, %s250
              %p247 = scmp.ge.s32.totalorder %s246, 1
              %s251 = sphi %s5, %s5
              %s252 = sphi [#allocation9], [#allocation9]
            $region85: #{tpu_custom_call.1} parent=81 // loop_header_branch
              %249 = sbr.rel (%p247) target = $region89
            $region86: #{tpu_custom_call.1} parent=81 // loop_body
              %v253 = vld [vmem:[%s251] sm:%s244]
              %254 = vst [vmem:[%s252] sm:%s244] %v253
            $region87: #{tpu_custom_call.1} parent=81 // loop_footer
              %s250 = sadd.s32 1, %s246
            $region88: #{tpu_custom_call.1} parent=81 // loop_footer_branch
              %245 = sbr.rel target = $region84
            $region89: #{tpu_custom_call.1} parent=81 // loop_exit
              _
          $region82: #{tpu_custom_call.1} parent=31 // pred_fallthru
            _
          // Predicated region
          $region101: #{tpu_custom_call.1} parent=31 // pred_check
            _
          $region102: #{tpu_custom_call.1} parent=31 // pred_check_branch
            %278 = sbr.rel (0) target = $region104
          $region103: #{tpu_custom_call.1} parent=31 // pred_region
            %279 = vsyncadd %s235, 16
          $region104: #{tpu_custom_call.1} parent=31 // pred_fallthru
            _
          %s280 = smul.u32 8, 2
          %s281 = smul.u32 %s280, 4
          %s282 = sshll.u32 %s281, 4
          %283 = dma.done [#allocation10], %s282
          %s284 = smul.u32 8, 16
          %s285 = smul.u32 %s284, 4
          %s286 = sshll.u32 %s285, 4
          %287 = dma.done %s166, %s286
          %s288 = smul.u32 1, 4
          %s289 = sshll.u32 %s288, 4
          %290 = dma.done %s178, %s289
          %s291 = smul.u32 128, 1
          %s292 = sshll.u32 %s291, 4
          %293 = dma.done %s223, %s292
          %s294 = smul.u32 1, 1
          %s295 = sshll.u32 %s294, 4
          %296 = dma.done %s235, %s295
        $region32: #{tpu_custom_call.1} parent=23 // pred_fallthru
          _
        %v297 = vld [vmem:[%s134] sm:$0xff]
        %v298 = vld [vmem:[%s134 + $0x8] sm:$0xff]
        %v299 = vld [vmem:[%s134 + $0x10] sm:$0xff]
        %v300 = vld [vmem:[#allocation5] sm:$0xff]
        %v301 = vld [vmem:[#allocation5 + $0x8] sm:$0xff]
        %v302 = vld [vmem:[#allocation5 + $0x10] sm:$0xff]
        %v303 = vld [vmem:[#allocation5 + $0x18] sm:$0xff]
        %v304 = vld [vmem:[#allocation5 + $0x20] sm:$0xff]
        %v305 = vld [vmem:[#allocation5 + $0x28] sm:$0xff]
        %v306 = vld [vmem:[#allocation5 + $0x30] sm:$0xff]
        %v307 = vld [vmem:[#allocation5 + $0x38] sm:$0xff]
        %v308 = vld [vmem:[#allocation7] sm:$0xf]
        %v310 = vlaneseq
        %v311 = vshrl.u32 %v310, 7
        %v312 = vsub.s32 0, %v311
        %v313 = vrot.slane %v308, %v312
        %v314 = vlaneseq
        %v315 = vshrl.u32 %v314, 7
        %v316 = vsub.s32 1, %v315
        %v317 = vrot.slane %v308, %v316
        %v318 = vlaneseq
        %v319 = vshrl.u32 %v318, 7
        %v320 = vsub.s32 2, %v319
        %v321 = vrot.slane %v308, %v320
        %v322 = vlaneseq
        %v323 = vshrl.u32 %v322, 7
        %v324 = vsub.s32 3, %v323
        %v325 = vrot.slane %v308, %v324
        %vm330 = vcmask 130048
        %v332 = vsel %vm330, %v297, 0
        %v335 = vsel %vm330, %v298, 0
        %v338 = vsel %vm330, %v299, 0
        %340 = vmatprep.subr.mxu0 %v301
        %341 = vmatpush1.msra.mxu0 %v300
        %342 = vmatprep.subr.mxu0 %v305
        %343 = vmatpush1.msra.mxu0 %v304
        %344 = vmatprep.subr.mxu0 0.0
        %345 = vmatpush1.msra.mxu0 0.0
        %346 = vmatprep.subr.mxu0 0.0
        %347 = vmatpush1.msra.mxu0 0.0
        %348 = vmatprep.subr.mxu0 0.0
        %349 = vmatpush1.msra.mxu0 0.0
        %350 = vmatprep.subr.mxu0 0.0
        %351 = vmatpush1.msra.mxu0 0.0
        %352 = vmatprep.subr.mxu0 0.0
        %353 = vmatpush1.msra.mxu0 0.0
        %354 = vmatprep.subr.mxu0 0.0
        %355 = vmatpush1.msra.mxu0 0.0
        %356 = vmatprep.subr.mxu0 0.0
        %357 = vmatpush1.msra.mxu0 0.0
        %358 = vmatprep.subr.mxu0 0.0
        %359 = vmatpush1.msra.mxu0 0.0
        %360 = vmatprep.subr.mxu0 0.0
        %361 = vmatpush1.msra.mxu0 0.0
        %362 = vmatprep.subr.mxu0 0.0
        %363 = vmatpush1.msra.mxu0 0.0
        %364 = vmatprep.subr.mxu0 0.0
        %365 = vmatpush1.msra.mxu0 0.0
        %366 = vmatprep.subr.mxu0 0.0
        %367 = vmatpush1.msra.mxu0 0.0
        %368 = vmatprep.subr.mxu0 0.0
        %369 = vmatpush1.msra.mxu0 0.0
        %370 = vmatprep.subr.mxu0 0.0
        %371 = vmatpush1.msra.mxu0 0.0
        %372 = vmatprep.subr.mxu0 0.0
        %373 = vmatpush1.msra.mxu0 0.0
        %374 = vmatprep.subr.mxu0 0.0
        %375 = vmatpush1.msra.mxu0 0.0
        %376 = vmatprep.subr.mxu0 0.0
        %377 = vmatpush1.msra.mxu0 0.0
        %378 = vmatprep.subr.mxu0 0.0
        %379 = vmatpush1.msra.mxu0 0.0
        %380 = vmatprep.subr.mxu0 0.0
        %381 = vmatpush1.msra.mxu0 0.0
        %382 = vmatprep.subr.mxu0 0.0
        %383 = vmatpush1.msra.mxu0 0.0
        %384 = vmatprep.subr.mxu0 0.0
        %385 = vmatpush1.msra.mxu0 0.0
        %386 = vmatprep.subr.mxu0 0.0
        %387 = vmatpush1.msra.mxu0 0.0
        %388 = vmatprep.subr.mxu0 0.0
        %389 = vmatpush1.msra.mxu0 0.0
        %390 = vmatprep.subr.mxu0 0.0
        %391 = vmatpush1.msra.mxu0 0.0
        %392 = vmatprep.subr.mxu0 0.0
        %393 = vmatpush1.msra.mxu0 0.0
        %394 = vmatprep.subr.mxu0 0.0
        %395 = vmatpush1.msra.mxu0 0.0
        %396 = vmatprep.subr.mxu0 0.0
        %397 = vmatpush1.msra.mxu0 0.0
        %398 = vmatprep.subr.mxu0 0.0
        %399 = vmatpush1.msra.mxu0 0.0
        %400 = vmatprep.subr.mxu0 0.0
        %401 = vmatpush1.msra.mxu0 0.0
        %402 = vmatprep.subr.mxu0 0.0
        %403 = vmatpush1.msra.mxu0 0.0
        %404 = vmatprep.mubr.f32.mxu0 0.0
        %405 = vmatmul.mubr.f32.gmra.mrb[0].mxu0 %v332
        %v406 = vpop.f32.mrb[0].mxu0
        %v407 = vadd.f32 %v313, %v406
        %v408 = vpop.f32.mrb[0].mxu0
        %v409 = vadd.f32 %v317, %v408
        %410 = vmatprep.mubr.f32.mxu0 0.0
        %411 = vmatmul.mubr.f32.gmra.mrb[0].mxu0 %v335
        %v412 = vpop.f32.mrb[0].mxu0
        %v413 = vadd.f32 %v313, %v412
        %v414 = vpop.f32.mrb[0].mxu0
        %v415 = vadd.f32 %v317, %v414
        %416 = vmatprep.mubr.f32.mxu0 0.0
        %417 = vmatmul.mubr.f32.gmra.mrb[0].mxu0 %v338
        %v418 = vpop.f32.mrb[0].mxu0
        %v419 = vadd.f32 %v313, %v418
        %v420 = vpop.f32.mrb[0].mxu0
        %v421 = vadd.f32 %v317, %v420
        %422 = vdwg.mxu0
        %423 = vmatprep.subr.mxu0 %v303
        %424 = vmatpush1.msra.mxu0 %v302
        %425 = vmatprep.subr.mxu0 %v307
        %426 = vmatpush1.msra.mxu0 %v306
        %427 = vmatprep.subr.mxu0 0.0
        %428 = vmatpush1.msra.mxu0 0.0
        %429 = vmatprep.subr.mxu0 0.0
        %430 = vmatpush1.msra.mxu0 0.0
        %431 = vmatprep.subr.mxu0 0.0
        %432 = vmatpush1.msra.mxu0 0.0
        %433 = vmatprep.subr.mxu0 0.0
        %434 = vmatpush1.msra.mxu0 0.0
        %435 = vmatprep.subr.mxu0 0.0
        %436 = vmatpush1.msra.mxu0 0.0
        %437 = vmatprep.subr.mxu0 0.0
        %438 = vmatpush1.msra.mxu0 0.0
        %439 = vmatprep.subr.mxu0 0.0
        %440 = vmatpush1.msra.mxu0 0.0
        %441 = vmatprep.subr.mxu0 0.0
        %442 = vmatpush1.msra.mxu0 0.0
        %443 = vmatprep.subr.mxu0 0.0
        %444 = vmatpush1.msra.mxu0 0.0
        %445 = vmatprep.subr.mxu0 0.0
        %446 = vmatpush1.msra.mxu0 0.0
        %447 = vmatprep.subr.mxu0 0.0
        %448 = vmatpush1.msra.mxu0 0.0
        %449 = vmatprep.subr.mxu0 0.0
        %450 = vmatpush1.msra.mxu0 0.0
        %451 = vmatprep.subr.mxu0 0.0
        %452 = vmatpush1.msra.mxu0 0.0
        %453 = vmatprep.subr.mxu0 0.0
        %454 = vmatpush1.msra.mxu0 0.0
        %455 = vmatprep.subr.mxu0 0.0
        %456 = vmatpush1.msra.mxu0 0.0
        %457 = vmatprep.subr.mxu0 0.0
        %458 = vmatpush1.msra.mxu0 0.0
        %459 = vmatprep.subr.mxu0 0.0
        %460 = vmatpush1.msra.mxu0 0.0
        %461 = vmatprep.subr.mxu0 0.0
        %462 = vmatpush1.msra.mxu0 0.0
        %463 = vmatprep.subr.mxu0 0.0
        %464 = vmatpush1.msra.mxu0 0.0
        %465 = vmatprep.subr.mxu0 0.0
        %466 = vmatpush1.msra.mxu0 0.0
        %467 = vmatprep.subr.mxu0 0.0
        %468 = vmatpush1.msra.mxu0 0.0
        %469 = vmatprep.subr.mxu0 0.0
        %470 = vmatpush1.msra.mxu0 0.0
        %471 = vmatprep.subr.mxu0 0.0
        %472 = vmatpush1.msra.mxu0 0.0
        %473 = vmatprep.subr.mxu0 0.0
        %474 = vmatpush1.msra.mxu0 0.0
        %475 = vmatprep.subr.mxu0 0.0
        %476 = vmatpush1.msra.mxu0 0.0
        %477 = vmatprep.subr.mxu0 0.0
        %478 = vmatpush1.msra.mxu0 0.0
        %479 = vmatprep.subr.mxu0 0.0
        %480 = vmatpush1.msra.mxu0 0.0
        %481 = vmatprep.subr.mxu0 0.0
        %482 = vmatpush1.msra.mxu0 0.0
        %483 = vmatprep.subr.mxu0 0.0
        %484 = vmatpush1.msra.mxu0 0.0
        %485 = vmatprep.subr.mxu0 0.0
        %486 = vmatpush1.msra.mxu0 0.0
        %487 = vmatprep.mubr.f32.mxu0 0.0
        %488 = vmatmul.mubr.f32.gmra.mrb[0].mxu0 %v332
        %v489 = vpop.f32.mrb[0].mxu0
        %v490 = vadd.f32 %v321, %v489
        %v491 = vpop.f32.mrb[0].mxu0
        %v492 = vadd.f32 %v325, %v491
        %493 = vmatprep.mubr.f32.mxu0 0.0
        %494 = vmatmul.mubr.f32.gmra.mrb[0].mxu0 %v335
        %v495 = vpop.f32.mrb[0].mxu0
        %v496 = vadd.f32 %v321, %v495
        %v497 = vpop.f32.mrb[0].mxu0
        %v498 = vadd.f32 %v325, %v497
        %499 = vmatprep.mubr.f32.mxu0 0.0
        %500 = vmatmul.mubr.f32.gmra.mrb[0].mxu0 %v338
        %v501 = vpop.f32.mrb[0].mxu0
        %v502 = vadd.f32 %v321, %v501
        %v503 = vpop.f32.mrb[0].mxu0
        %v504 = vadd.f32 %v325, %v503
        %505 = vdwg.mxu0
        %506 = vst [vmem:[#allocation4] sm:$0xff] %v407
        %507 = vst [vmem:[#allocation4 + $0x8] sm:$0xff] %v409
        %508 = vst [vmem:[#allocation4 + $0x10] sm:$0xff] %v490
        %509 = vst [vmem:[#allocation4 + $0x18] sm:$0xff] %v492
        %510 = vst [vmem:[#allocation4 + $0x20] sm:$0xff] %v413
        %511 = vst [vmem:[#allocation4 + $0x28] sm:$0xff] %v415
        %512 = vst [vmem:[#allocation4 + $0x30] sm:$0xff] %v496
        %513 = vst [vmem:[#allocation4 + $0x38] sm:$0xff] %v498
        %514 = vst [vmem:[#allocation4 + $0x40] sm:$0xff] %v419
        %515 = vst [vmem:[#allocation4 + $0x48] sm:$0xff] %v421
        %516 = vst [vmem:[#allocation4 + $0x50] sm:$0xff] %v502
        %517 = vst [vmem:[#allocation4 + $0x58] sm:$0xff] %v504
        %v518 = vld [vmem:[#allocation6] sm:$0xff]
        %v519 = vld [vmem:[#allocation6 + $0x8] sm:$0xff]
        %v520 = vld [vmem:[#allocation6 + $0x10] sm:$0xff]
        %v521 = vld [vmem:[#allocation6 + $0x18] sm:$0xff]
        %v522 = vld [vmem:[#allocation6 + $0x20] sm:$0xff]
        %v523 = vld [vmem:[#allocation6 + $0x28] sm:$0xff]
        %v524 = vld [vmem:[#allocation6 + $0x30] sm:$0xff]
        %v525 = vld [vmem:[#allocation6 + $0x38] sm:$0xff]
        %v526 = vld [vmem:[#allocation6 + $0x40] sm:$0xff]
        %v527 = vld [vmem:[#allocation6 + $0x48] sm:$0xff]
        %v528 = vld [vmem:[#allocation6 + $0x50] sm:$0xff]
        %v529 = vld [vmem:[#allocation6 + $0x58] sm:$0xff]
        %v530 = vld [vmem:[#allocation6 + $0x60] sm:$0xff]
        %v531 = vld [vmem:[#allocation6 + $0x68] sm:$0xff]
        %v532 = vld [vmem:[#allocation6 + $0x70] sm:$0xff]
        %v533 = vld [vmem:[#allocation6 + $0x78] sm:$0xff]
        %v534 = vld [vmem:[#allocation6 + $0x80] sm:$0xff]
        %v535 = vld [vmem:[#allocation6 + $0x88] sm:$0xff]
        %v536 = vld [vmem:[#allocation6 + $0x90] sm:$0xff]
        %v537 = vld [vmem:[#allocation6 + $0x98] sm:$0xff]
        %v538 = vld [vmem:[#allocation6 + $0xa0] sm:$0xff]
        %v539 = vld [vmem:[#allocation6 + $0xa8] sm:$0xff]
        %v540 = vld [vmem:[#allocation6 + $0xb0] sm:$0xff]
        %v541 = vld [vmem:[#allocation6 + $0xb8] sm:$0xff]
        %v542 = vld [vmem:[#allocation6 + $0xc0] sm:$0xff]
        %v543 = vld [vmem:[#allocation6 + $0xc8] sm:$0xff]
        %v544 = vld [vmem:[#allocation6 + $0xd0] sm:$0xff]
        %v545 = vld [vmem:[#allocation6 + $0xd8] sm:$0xff]
        %v546 = vld [vmem:[#allocation6 + $0xe0] sm:$0xff]
        %v547 = vld [vmem:[#allocation6 + $0xe8] sm:$0xff]
        %v548 = vld [vmem:[#allocation6 + $0xf0] sm:$0xff]
        %v549 = vld [vmem:[#allocation6 + $0xf8] sm:$0xff]
        %v550 = vld [vmem:[#allocation6 + $0x100] sm:$0xff]
        %v551 = vld [vmem:[#allocation6 + $0x108] sm:$0xff]
        %v552 = vld [vmem:[#allocation6 + $0x110] sm:$0xff]
        %v553 = vld [vmem:[#allocation6 + $0x118] sm:$0xff]
        %v554 = vld [vmem:[#allocation6 + $0x120] sm:$0xff]
        %v555 = vld [vmem:[#allocation6 + $0x128] sm:$0xff]
        %v556 = vld [vmem:[#allocation6 + $0x130] sm:$0xff]
        %v557 = vld [vmem:[#allocation6 + $0x138] sm:$0xff]
        %v558 = vld [vmem:[#allocation6 + $0x140] sm:$0xff]
        %v559 = vld [vmem:[#allocation6 + $0x148] sm:$0xff]
        %v560 = vld [vmem:[#allocation6 + $0x150] sm:$0xff]
        %v561 = vld [vmem:[#allocation6 + $0x158] sm:$0xff]
        %v562 = vld [vmem:[#allocation6 + $0x160] sm:$0xff]
        %v563 = vld [vmem:[#allocation6 + $0x168] sm:$0xff]
        %v564 = vld [vmem:[#allocation6 + $0x170] sm:$0xff]
        %v565 = vld [vmem:[#allocation6 + $0x178] sm:$0xff]
        %v566 = vld [vmem:[#allocation6 + $0x180] sm:$0xff]
        %v567 = vld [vmem:[#allocation6 + $0x188] sm:$0xff]
        %v568 = vld [vmem:[#allocation6 + $0x190] sm:$0xff]
        %v569 = vld [vmem:[#allocation6 + $0x198] sm:$0xff]
        %v570 = vld [vmem:[#allocation6 + $0x1a0] sm:$0xff]
        %v571 = vld [vmem:[#allocation6 + $0x1a8] sm:$0xff]
        %v572 = vld [vmem:[#allocation6 + $0x1b0] sm:$0xff]
        %v573 = vld [vmem:[#allocation6 + $0x1b8] sm:$0xff]
        %v574 = vld [vmem:[#allocation6 + $0x1c0] sm:$0xff]
        %v575 = vld [vmem:[#allocation6 + $0x1c8] sm:$0xff]
        %v576 = vld [vmem:[#allocation6 + $0x1d0] sm:$0xff]
        %v577 = vld [vmem:[#allocation6 + $0x1d8] sm:$0xff]
        %v578 = vld [vmem:[#allocation6 + $0x1e0] sm:$0xff]
        %v579 = vld [vmem:[#allocation6 + $0x1e8] sm:$0xff]
        %v580 = vld [vmem:[#allocation6 + $0x1f0] sm:$0xff]
        %v581 = vld [vmem:[#allocation6 + $0x1f8] sm:$0xff]
        %v582 = vld [vmem:[#allocation2] sm:$0xff]
        %v583 = vld [vmem:[#allocation3] sm:$0xff]
        %s584 = smul.u32 0, 4
        %s585 = smul.addr %s584, 8
        %s586 = scalar_lea.vmem [#allocation4], %s585
        %v587 = vld [vmem:[%s586] sm:$0xff]
        %v588 = vld [vmem:[%s586 + $0x8] sm:$0xff]
        %v589 = vld [vmem:[%s586 + $0x10] sm:$0xff]
        %v590 = vld [vmem:[%s586 + $0x18] sm:$0xff]
        %591 = vmatprep.subr.mxu0 %v519
        %592 = vmatpush1.msra.mxu0 %v518
        %593 = vmatprep.subr.mxu0 %v523
        %594 = vmatpush1.msra.mxu0 %v522
        %595 = vmatprep.subr.mxu0 %v527
        %596 = vmatpush1.msra.mxu0 %v526
        %597 = vmatprep.subr.mxu0 %v531
        %598 = vmatpush1.msra.mxu0 %v530
        %599 = vmatprep.subr.mxu0 %v535
        %600 = vmatpush1.msra.mxu0 %v534
        %601 = vmatprep.subr.mxu0 %v539
        %602 = vmatpush1.msra.mxu0 %v538
        %603 = vmatprep.subr.mxu0 %v543
        %604 = vmatpush1.msra.mxu0 %v542
        %605 = vmatprep.subr.mxu0 %v547
        %606 = vmatpush1.msra.mxu0 %v546
        %607 = vmatprep.subr.mxu0 %v551
        %608 = vmatpush1.msra.mxu0 %v550
        %609 = vmatprep.subr.mxu0 %v555
        %610 = vmatpush1.msra.mxu0 %v554
        %611 = vmatprep.subr.mxu0 %v559
        %612 = vmatpush1.msra.mxu0 %v558
        %613 = vmatprep.subr.mxu0 %v563
        %614 = vmatpush1.msra.mxu0 %v562
        %615 = vmatprep.subr.mxu0 %v567
        %616 = vmatpush1.msra.mxu0 %v566
        %617 = vmatprep.subr.mxu0 %v571
        %618 = vmatpush1.msra.mxu0 %v570
        %619 = vmatprep.subr.mxu0 %v575
        %620 = vmatpush1.msra.mxu0 %v574
        %621 = vmatprep.subr.mxu0 %v579
        %622 = vmatpush1.msra.mxu0 %v578
        %623 = vmatprep.subr.mxu0 0.0
        %624 = vmatpush1.msra.mxu0 0.0
        %625 = vmatprep.subr.mxu0 0.0
        %626 = vmatpush1.msra.mxu0 0.0
        %627 = vmatprep.subr.mxu0 0.0
        %628 = vmatpush1.msra.mxu0 0.0
        %629 = vmatprep.subr.mxu0 0.0
        %630 = vmatpush1.msra.mxu0 0.0
        %631 = vmatprep.subr.mxu0 0.0
        %632 = vmatpush1.msra.mxu0 0.0
        %633 = vmatprep.subr.mxu0 0.0
        %634 = vmatpush1.msra.mxu0 0.0
        %635 = vmatprep.subr.mxu0 0.0
        %636 = vmatpush1.msra.mxu0 0.0
        %637 = vmatprep.subr.mxu0 0.0
        %638 = vmatpush1.msra.mxu0 0.0
        %639 = vmatprep.subr.mxu0 0.0
        %640 = vmatpush1.msra.mxu0 0.0
        %641 = vmatprep.subr.mxu0 0.0
        %642 = vmatpush1.msra.mxu0 0.0
        %643 = vmatprep.subr.mxu0 0.0
        %644 = vmatpush1.msra.mxu0 0.0
        %645 = vmatprep.subr.mxu0 0.0
        %646 = vmatpush1.msra.mxu0 0.0
        %647 = vmatprep.subr.mxu0 0.0
        %648 = vmatpush1.msra.mxu0 0.0
        %649 = vmatprep.subr.mxu0 0.0
        %650 = vmatpush1.msra.mxu0 0.0
        %651 = vmatprep.subr.mxu0 0.0
        %652 = vmatpush1.msra.mxu0 0.0
        %653 = vmatprep.subr.mxu0 0.0
        %654 = vmatpush1.msra.mxu0 0.0
        %655 = vmatprep.mubr.f32.mxu0 0.0
        %656 = vmatmul.mubr.f32.gmra.mrb[0].mxu0 %v582
        %v657 = vpop.f32.mrb[0].mxu0
        %v658 = vadd.f32 0.0, %v657
        %v659 = vpop.f32.mrb[0].mxu0
        %v660 = vadd.f32 0.0, %v659
        %661 = vdwg.mxu0
        %662 = vmatprep.subr.mxu0 %v521
        %663 = vmatpush1.msra.mxu0 %v520
        %664 = vmatprep.subr.mxu0 %v525
        %665 = vmatpush1.msra.mxu0 %v524
        %666 = vmatprep.subr.mxu0 %v529
        %667 = vmatpush1.msra.mxu0 %v528
        %668 = vmatprep.subr.mxu0 %v533
        %669 = vmatpush1.msra.mxu0 %v532
        %670 = vmatprep.subr.mxu0 %v537
        %671 = vmatpush1.msra.mxu0 %v536
        %672 = vmatprep.subr.mxu0 %v541
        %673 = vmatpush1.msra.mxu0 %v540
        %674 = vmatprep.subr.mxu0 %v545
        %675 = vmatpush1.msra.mxu0 %v544
        %676 = vmatprep.subr.mxu0 %v549
        %677 = vmatpush1.msra.mxu0 %v548
        %678 = vmatprep.subr.mxu0 %v553
        %679 = vmatpush1.msra.mxu0 %v552
        %680 = vmatprep.subr.mxu0 %v557
        %681 = vmatpush1.msra.mxu0 %v556
        %682 = vmatprep.subr.mxu0 %v561
        %683 = vmatpush1.msra.mxu0 %v560
        %684 = vmatprep.subr.mxu0 %v565
        %685 = vmatpush1.msra.mxu0 %v564
        %686 = vmatprep.subr.mxu0 %v569
        %687 = vmatpush1.msra.mxu0 %v568
        %688 = vmatprep.subr.mxu0 %v573
        %689 = vmatpush1.msra.mxu0 %v572
        %690 = vmatprep.subr.mxu0 %v577
        %691 = vmatpush1.msra.mxu0 %v576
        %692 = vmatprep.subr.mxu0 %v581
        %693 = vmatpush1.msra.mxu0 %v580
        %694 = vmatprep.subr.mxu0 0.0
        %695 = vmatpush1.msra.mxu0 0.0
        %696 = vmatprep.subr.mxu0 0.0
        %697 = vmatpush1.msra.mxu0 0.0
        %698 = vmatprep.subr.mxu0 0.0
        %699 = vmatpush1.msra.mxu0 0.0
        %700 = vmatprep.subr.mxu0 0.0
        %701 = vmatpush1.msra.mxu0 0.0
        %702 = vmatprep.subr.mxu0 0.0
        %703 = vmatpush1.msra.mxu0 0.0
        %704 = vmatprep.subr.mxu0 0.0
        %705 = vmatpush1.msra.mxu0 0.0
        %706 = vmatprep.subr.mxu0 0.0
        %707 = vmatpush1.msra.mxu0 0.0
        %708 = vmatprep.subr.mxu0 0.0
        %709 = vmatpush1.msra.mxu0 0.0
        %710 = vmatprep.subr.mxu0 0.0
        %711 = vmatpush1.msra.mxu0 0.0
        %712 = vmatprep.subr.mxu0 0.0
        %713 = vmatpush1.msra.mxu0 0.0
        %714 = vmatprep.subr.mxu0 0.0
        %715 = vmatpush1.msra.mxu0 0.0
        %716 = vmatprep.subr.mxu0 0.0
        %717 = vmatpush1.msra.mxu0 0.0
        %718 = vmatprep.subr.mxu0 0.0
        %719 = vmatpush1.msra.mxu0 0.0
        %720 = vmatprep.subr.mxu0 0.0
        %721 = vmatpush1.msra.mxu0 0.0
        %722 = vmatprep.subr.mxu0 0.0
        %723 = vmatpush1.msra.mxu0 0.0
        %724 = vmatprep.subr.mxu0 0.0
        %725 = vmatpush1.msra.mxu0 0.0
        %726 = vmatprep.mubr.f32.mxu0 0.0
        %727 = vmatmul.mubr.f32.gmra.mrb[0].mxu0 %v582
        %v728 = vpop.f32.mrb[0].mxu0
        %v729 = vadd.f32 0.0, %v728
        %v730 = vpop.f32.mrb[0].mxu0
        %v731 = vadd.f32 0.0, %v730
        %732 = vdwg.mxu0
        %v733 = vadd.f32 %v587, %v658
        %v734 = vadd.f32 %v588, %v660
        %v735 = vadd.f32 %v589, %v729
        %v736 = vadd.f32 %v590, %v731
        %v737 = vxor.u32 %v733, 2147483648
        %v738 = vmul.f32 %v737, 1.442695
        %v739 = vpow.pop %v738
        %v740 = vadd.f32 %v739, 1.0
        %v741 = vrcp.pop %v740
        %v742 = vmul.f32 1.0, %v741
        %v743 = vxor.u32 %v734, 2147483648
        %v744 = vmul.f32 %v743, 1.442695
        %v745 = vpow.pop %v744
        %v746 = vadd.f32 %v745, 1.0
        %v747 = vrcp.pop %v746
        %v748 = vmul.f32 1.0, %v747
        %v749 = vtanh.pop %v735
        %v750 = vxor.u32 %v736, 2147483648
        %v751 = vmul.f32 %v750, 1.442695
        %v752 = vpow.pop %v751
        %v753 = vadd.f32 %v752, 1.0
        %v754 = vrcp.pop %v753
        %v755 = vmul.f32 1.0, %v754
        %v756 = vmul.f32 %v748, %v583
        %v757 = vmul.f32 %v742, %v749
        %v758 = vadd.f32 %v756, %v757
        %v759 = vtanh.pop %v758
        %v760 = vmul.f32 %v755, %v759
        %s761 = smul.u32 %s26, 3
        %p762 = scmp.lt.s32.totalorder %s761, 8
        %s763 = scalar_select %p762, 1, 0
        %v764 = vstv %s763
        %vm765 = vcmp.eq.s32.totalorder %v764, 1
        %v766 = vsel %vm765, %v758, %v583
        %v767 = vsel %vm765, %v760, %v582
        %s768 = smul.u32 1, 4
        %s769 = smul.addr %s768, 8
        %s770 = scalar_lea.vmem [#allocation4], %s769
        %v771 = vld [vmem:[%s770] sm:$0xff]
        %v772 = vld [vmem:[%s770 + $0x8] sm:$0xff]
        %v773 = vld [vmem:[%s770 + $0x10] sm:$0xff]
        %v774 = vld [vmem:[%s770 + $0x18] sm:$0xff]
        %775 = vmatprep.subr.mxu0 %v519
        %776 = vmatpush1.msra.mxu0 %v518
        %777 = vmatprep.subr.mxu0 %v523
        %778 = vmatpush1.msra.mxu0 %v522
        %779 = vmatprep.subr.mxu0 %v527
        %780 = vmatpush1.msra.mxu0 %v526
        %781 = vmatprep.subr.mxu0 %v531
        %782 = vmatpush1.msra.mxu0 %v530
        %783 = vmatprep.subr.mxu0 %v535
        %784 = vmatpush1.msra.mxu0 %v534
        %785 = vmatprep.subr.mxu0 %v539
        %786 = vmatpush1.msra.mxu0 %v538
        %787 = vmatprep.subr.mxu0 %v543
        %788 = vmatpush1.msra.mxu0 %v542
        %789 = vmatprep.subr.mxu0 %v547
        %790 = vmatpush1.msra.mxu0 %v546
        %791 = vmatprep.subr.mxu0 %v551
        %792 = vmatpush1.msra.mxu0 %v550
        %793 = vmatprep.subr.mxu0 %v555
        %794 = vmatpush1.msra.mxu0 %v554
        %795 = vmatprep.subr.mxu0 %v559
        %796 = vmatpush1.msra.mxu0 %v558
        %797 = vmatprep.subr.mxu0 %v563
        %798 = vmatpush1.msra.mxu0 %v562
        %799 = vmatprep.subr.mxu0 %v567
        %800 = vmatpush1.msra.mxu0 %v566
        %801 = vmatprep.subr.mxu0 %v571
        %802 = vmatpush1.msra.mxu0 %v570
        %803 = vmatprep.subr.mxu0 %v575
        %804 = vmatpush1.msra.mxu0 %v574
        %805 = vmatprep.subr.mxu0 %v579
        %806 = vmatpush1.msra.mxu0 %v578
        %807 = vmatprep.subr.mxu0 0.0
        %808 = vmatpush1.msra.mxu0 0.0
        %809 = vmatprep.subr.mxu0 0.0
        %810 = vmatpush1.msra.mxu0 0.0
        %811 = vmatprep.subr.mxu0 0.0
        %812 = vmatpush1.msra.mxu0 0.0
        %813 = vmatprep.subr.mxu0 0.0
        %814 = vmatpush1.msra.mxu0 0.0
        %815 = vmatprep.subr.mxu0 0.0
        %816 = vmatpush1.msra.mxu0 0.0
        %817 = vmatprep.subr.mxu0 0.0
        %818 = vmatpush1.msra.mxu0 0.0
        %819 = vmatprep.subr.mxu0 0.0
        %820 = vmatpush1.msra.mxu0 0.0
        %821 = vmatprep.subr.mxu0 0.0
        %822 = vmatpush1.msra.mxu0 0.0
        %823 = vmatprep.subr.mxu0 0.0
        %824 = vmatpush1.msra.mxu0 0.0
        %825 = vmatprep.subr.mxu0 0.0
        %826 = vmatpush1.msra.mxu0 0.0
        %827 = vmatprep.subr.mxu0 0.0
        %828 = vmatpush1.msra.mxu0 0.0
        %829 = vmatprep.subr.mxu0 0.0
        %830 = vmatpush1.msra.mxu0 0.0
        %831 = vmatprep.subr.mxu0 0.0
        %832 = vmatpush1.msra.mxu0 0.0
        %833 = vmatprep.subr.mxu0 0.0
        %834 = vmatpush1.msra.mxu0 0.0
        %835 = vmatprep.subr.mxu0 0.0
        %836 = vmatpush1.msra.mxu0 0.0
        %837 = vmatprep.subr.mxu0 0.0
        %838 = vmatpush1.msra.mxu0 0.0
        %839 = vmatprep.mubr.f32.mxu0 0.0
        %840 = vmatmul.mubr.f32.gmra.mrb[0].mxu0 %v767
        %v841 = vpop.f32.mrb[0].mxu0
        %v842 = vadd.f32 0.0, %v841
        %v843 = vpop.f32.mrb[0].mxu0
        %v844 = vadd.f32 0.0, %v843
        %845 = vdwg.mxu0
        %846 = vmatprep.subr.mxu0 %v521
        %847 = vmatpush1.msra.mxu0 %v520
        %848 = vmatprep.subr.mxu0 %v525
        %849 = vmatpush1.msra.mxu0 %v524
        %850 = vmatprep.subr.mxu0 %v529
        %851 = vmatpush1.msra.mxu0 %v528
        %852 = vmatprep.subr.mxu0 %v533
        %853 = vmatpush1.msra.mxu0 %v532
        %854 = vmatprep.subr.mxu0 %v537
        %855 = vmatpush1.msra.mxu0 %v536
        %856 = vmatprep.subr.mxu0 %v541
        %857 = vmatpush1.msra.mxu0 %v540
        %858 = vmatprep.subr.mxu0 %v545
        %859 = vmatpush1.msra.mxu0 %v544
        %860 = vmatprep.subr.mxu0 %v549
        %861 = vmatpush1.msra.mxu0 %v548
        %862 = vmatprep.subr.mxu0 %v553
        %863 = vmatpush1.msra.mxu0 %v552
        %864 = vmatprep.subr.mxu0 %v557
        %865 = vmatpush1.msra.mxu0 %v556
        %866 = vmatprep.subr.mxu0 %v561
        %867 = vmatpush1.msra.mxu0 %v560
        %868 = vmatprep.subr.mxu0 %v565
        %869 = vmatpush1.msra.mxu0 %v564
        %870 = vmatprep.subr.mxu0 %v569
        %871 = vmatpush1.msra.mxu0 %v568
        %872 = vmatprep.subr.mxu0 %v573
        %873 = vmatpush1.msra.mxu0 %v572
        %874 = vmatprep.subr.mxu0 %v577
        %875 = vmatpush1.msra.mxu0 %v576
        %876 = vmatprep.subr.mxu0 %v581
        %877 = vmatpush1.msra.mxu0 %v580
        %878 = vmatprep.subr.mxu0 0.0
        %879 = vmatpush1.msra.mxu0 0.0
        %880 = vmatprep.subr.mxu0 0.0
        %881 = vmatpush1.msra.mxu0 0.0
        %882 = vmatprep.subr.mxu0 0.0
        %883 = vmatpush1.msra.mxu0 0.0
        %884 = vmatprep.subr.mxu0 0.0
        %885 = vmatpush1.msra.mxu0 0.0
        %886 = vmatprep.subr.mxu0 0.0
        %887 = vmatpush1.msra.mxu0 0.0
        %888 = vmatprep.subr.mxu0 0.0
        %889 = vmatpush1.msra.mxu0 0.0
        %890 = vmatprep.subr.mxu0 0.0
        %891 = vmatpush1.msra.mxu0 0.0
        %892 = vmatprep.subr.mxu0 0.0
        %893 = vmatpush1.msra.mxu0 0.0
        %894 = vmatprep.subr.mxu0 0.0
        %895 = vmatpush1.msra.mxu0 0.0
        %896 = vmatprep.subr.mxu0 0.0
        %897 = vmatpush1.msra.mxu0 0.0
        %898 = vmatprep.subr.mxu0 0.0
        %899 = vmatpush1.msra.mxu0 0.0
        %900 = vmatprep.subr.mxu0 0.0
        %901 = vmatpush1.msra.mxu0 0.0
        %902 = vmatprep.subr.mxu0 0.0
        %903 = vmatpush1.msra.mxu0 0.0
        %904 = vmatprep.subr.mxu0 0.0
        %905 = vmatpush1.msra.mxu0 0.0
        %906 = vmatprep.subr.mxu0 0.0
        %907 = vmatpush1.msra.mxu0 0.0
        %908 = vmatprep.subr.mxu0 0.0
        %909 = vmatpush1.msra.mxu0 0.0
        %910 = vmatprep.mubr.f32.mxu0 0.0
        %911 = vmatmul.mubr.f32.gmra.mrb[0].mxu0 %v767
        %v912 = vpop.f32.mrb[0].mxu0
        %v913 = vadd.f32 0.0, %v912
        %v914 = vpop.f32.mrb[0].mxu0
        %v915 = vadd.f32 0.0, %v914
        %916 = vdwg.mxu0
        %v917 = vadd.f32 %v771, %v842
        %v918 = vadd.f32 %v772, %v844
        %v919 = vadd.f32 %v773, %v913
        %v920 = vadd.f32 %v774, %v915
        %v921 = vxor.u32 %v917, 2147483648
        %v922 = vmul.f32 %v921, 1.442695
        %v923 = vpow.pop %v922
        %v924 = vadd.f32 %v923, 1.0
        %v925 = vrcp.pop %v924
        %v926 = vmul.f32 1.0, %v925
        %v927 = vxor.u32 %v918, 2147483648
        %v928 = vmul.f32 %v927, 1.442695
        %v929 = vpow.pop %v928
        %v930 = vadd.f32 %v929, 1.0
        %v931 = vrcp.pop %v930
        %v932 = vmul.f32 1.0, %v931
        %v933 = vtanh.pop %v919
        %v934 = vxor.u32 %v920, 2147483648
        %v935 = vmul.f32 %v934, 1.442695
        %v936 = vpow.pop %v935
        %v937 = vadd.f32 %v936, 1.0
        %v938 = vrcp.pop %v937
        %v939 = vmul.f32 1.0, %v938
        %v940 = vmul.f32 %v932, %v766
        %v941 = vmul.f32 %v926, %v933
        %v942 = vadd.f32 %v940, %v941
        %v943 = vtanh.pop %v942
        %v944 = vmul.f32 %v939, %v943
        %s945 = sadd.s32 %s761, 1
        %p946 = scmp.lt.s32.totalorder %s945, 8
        %s947 = scalar_select %p946, 1, 0
        %v948 = vstv %s947
        %vm949 = vcmp.eq.s32.totalorder %v948, 1
        %v950 = vsel %vm949, %v942, %v766
        %v951 = vsel %vm949, %v944, %v767
        %s952 = smul.u32 2, 4
        %s953 = smul.addr %s952, 8
        %s954 = scalar_lea.vmem [#allocation4], %s953
        %v955 = vld [vmem:[%s954] sm:$0xff]
        %v956 = vld [vmem:[%s954 + $0x8] sm:$0xff]
        %v957 = vld [vmem:[%s954 + $0x10] sm:$0xff]
        %v958 = vld [vmem:[%s954 + $0x18] sm:$0xff]
        %959 = vmatprep.subr.mxu0 %v519
        %960 = vmatpush1.msra.mxu0 %v518
        %961 = vmatprep.subr.mxu0 %v523
        %962 = vmatpush1.msra.mxu0 %v522
        %963 = vmatprep.subr.mxu0 %v527
        %964 = vmatpush1.msra.mxu0 %v526
        %965 = vmatprep.subr.mxu0 %v531
        %966 = vmatpush1.msra.mxu0 %v530
        %967 = vmatprep.subr.mxu0 %v535
        %968 = vmatpush1.msra.mxu0 %v534
        %969 = vmatprep.subr.mxu0 %v539
        %970 = vmatpush1.msra.mxu0 %v538
        %971 = vmatprep.subr.mxu0 %v543
        %972 = vmatpush1.msra.mxu0 %v542
        %973 = vmatprep.subr.mxu0 %v547
        %974 = vmatpush1.msra.mxu0 %v546
        %975 = vmatprep.subr.mxu0 %v551
        %976 = vmatpush1.msra.mxu0 %v550
        %977 = vmatprep.subr.mxu0 %v555
        %978 = vmatpush1.msra.mxu0 %v554
        %979 = vmatprep.subr.mxu0 %v559
        %980 = vmatpush1.msra.mxu0 %v558
        %981 = vmatprep.subr.mxu0 %v563
        %982 = vmatpush1.msra.mxu0 %v562
        %983 = vmatprep.subr.mxu0 %v567
        %984 = vmatpush1.msra.mxu0 %v566
        %985 = vmatprep.subr.mxu0 %v571
        %986 = vmatpush1.msra.mxu0 %v570
        %987 = vmatprep.subr.mxu0 %v575
        %988 = vmatpush1.msra.mxu0 %v574
        %989 = vmatprep.subr.mxu0 %v579
        %990 = vmatpush1.msra.mxu0 %v578
        %991 = vmatprep.subr.mxu0 0.0
        %992 = vmatpush1.msra.mxu0 0.0
        %993 = vmatprep.subr.mxu0 0.0
        %994 = vmatpush1.msra.mxu0 0.0
        %995 = vmatprep.subr.mxu0 0.0
        %996 = vmatpush1.msra.mxu0 0.0
        %997 = vmatprep.subr.mxu0 0.0
        %998 = vmatpush1.msra.mxu0 0.0
        %999 = vmatprep.subr.mxu0 0.0
        %1000 = vmatpush1.msra.mxu0 0.0
        %1001 = vmatprep.subr.mxu0 0.0
        %1002 = vmatpush1.msra.mxu0 0.0
        %1003 = vmatprep.subr.mxu0 0.0
        %1004 = vmatpush1.msra.mxu0 0.0
        %1005 = vmatprep.subr.mxu0 0.0
        %1006 = vmatpush1.msra.mxu0 0.0
        %1007 = vmatprep.subr.mxu0 0.0
        %1008 = vmatpush1.msra.mxu0 0.0
        %1009 = vmatprep.subr.mxu0 0.0
        %1010 = vmatpush1.msra.mxu0 0.0
        %1011 = vmatprep.subr.mxu0 0.0
        %1012 = vmatpush1.msra.mxu0 0.0
        %1013 = vmatprep.subr.mxu0 0.0
        %1014 = vmatpush1.msra.mxu0 0.0
        %1015 = vmatprep.subr.mxu0 0.0
        %1016 = vmatpush1.msra.mxu0 0.0
        %1017 = vmatprep.subr.mxu0 0.0
        %1018 = vmatpush1.msra.mxu0 0.0
        %1019 = vmatprep.subr.mxu0 0.0
        %1020 = vmatpush1.msra.mxu0 0.0
        %1021 = vmatprep.subr.mxu0 0.0
        %1022 = vmatpush1.msra.mxu0 0.0
        %1023 = vmatprep.mubr.f32.mxu0 0.0
        %1024 = vmatmul.mubr.f32.gmra.mrb[0].mxu0 %v951
        %v1025 = vpop.f32.mrb[0].mxu0
        %v1026 = vadd.f32 0.0, %v1025
        %v1027 = vpop.f32.mrb[0].mxu0
        %v1028 = vadd.f32 0.0, %v1027
        %1029 = vdwg.mxu0
        %1030 = vmatprep.subr.mxu0 %v521
        %1031 = vmatpush1.msra.mxu0 %v520
        %1032 = vmatprep.subr.mxu0 %v525
        %1033 = vmatpush1.msra.mxu0 %v524
        %1034 = vmatprep.subr.mxu0 %v529
        %1035 = vmatpush1.msra.mxu0 %v528
        %1036 = vmatprep.subr.mxu0 %v533
        %1037 = vmatpush1.msra.mxu0 %v532
        %1038 = vmatprep.subr.mxu0 %v537
        %1039 = vmatpush1.msra.mxu0 %v536
        %1040 = vmatprep.subr.mxu0 %v541
        %1041 = vmatpush1.msra.mxu0 %v540
        %1042 = vmatprep.subr.mxu0 %v545
        %1043 = vmatpush1.msra.mxu0 %v544
        %1044 = vmatprep.subr.mxu0 %v549
        %1045 = vmatpush1.msra.mxu0 %v548
        %1046 = vmatprep.subr.mxu0 %v553
        %1047 = vmatpush1.msra.mxu0 %v552
        %1048 = vmatprep.subr.mxu0 %v557
        %1049 = vmatpush1.msra.mxu0 %v556
        %1050 = vmatprep.subr.mxu0 %v561
        %1051 = vmatpush1.msra.mxu0 %v560
        %1052 = vmatprep.subr.mxu0 %v565
        %1053 = vmatpush1.msra.mxu0 %v564
        %1054 = vmatprep.subr.mxu0 %v569
        %1055 = vmatpush1.msra.mxu0 %v568
        %1056 = vmatprep.subr.mxu0 %v573
        %1057 = vmatpush1.msra.mxu0 %v572
        %1058 = vmatprep.subr.mxu0 %v577
        %1059 = vmatpush1.msra.mxu0 %v576
        %1060 = vmatprep.subr.mxu0 %v581
        %1061 = vmatpush1.msra.mxu0 %v580
        %1062 = vmatprep.subr.mxu0 0.0
        %1063 = vmatpush1.msra.mxu0 0.0
        %1064 = vmatprep.subr.mxu0 0.0
        %1065 = vmatpush1.msra.mxu0 0.0
        %1066 = vmatprep.subr.mxu0 0.0
        %1067 = vmatpush1.msra.mxu0 0.0
        %1068 = vmatprep.subr.mxu0 0.0
        %1069 = vmatpush1.msra.mxu0 0.0
        %1070 = vmatprep.subr.mxu0 0.0
        %1071 = vmatpush1.msra.mxu0 0.0
        %1072 = vmatprep.subr.mxu0 0.0
        %1073 = vmatpush1.msra.mxu0 0.0
        %1074 = vmatprep.subr.mxu0 0.0
        %1075 = vmatpush1.msra.mxu0 0.0
        %1076 = vmatprep.subr.mxu0 0.0
        %1077 = vmatpush1.msra.mxu0 0.0
        %1078 = vmatprep.subr.mxu0 0.0
        %1079 = vmatpush1.msra.mxu0 0.0
        %1080 = vmatprep.subr.mxu0 0.0
        %1081 = vmatpush1.msra.mxu0 0.0
        %1082 = vmatprep.subr.mxu0 0.0
        %1083 = vmatpush1.msra.mxu0 0.0
        %1084 = vmatprep.subr.mxu0 0.0
        %1085 = vmatpush1.msra.mxu0 0.0
        %1086 = vmatprep.subr.mxu0 0.0
        %1087 = vmatpush1.msra.mxu0 0.0
        %1088 = vmatprep.subr.mxu0 0.0
        %1089 = vmatpush1.msra.mxu0 0.0
        %1090 = vmatprep.subr.mxu0 0.0
        %1091 = vmatpush1.msra.mxu0 0.0
        %1092 = vmatprep.subr.mxu0 0.0
        %1093 = vmatpush1.msra.mxu0 0.0
        %1094 = vmatprep.mubr.f32.mxu0 0.0
        %1095 = vmatmul.mubr.f32.gmra.mrb[0].mxu0 %v951
        %v1096 = vpop.f32.mrb[0].mxu0
        %v1097 = vadd.f32 0.0, %v1096
        %v1098 = vpop.f32.mrb[0].mxu0
        %v1099 = vadd.f32 0.0, %v1098
        %1100 = vdwg.mxu0
        %v1101 = vadd.f32 %v955, %v1026
        %v1102 = vadd.f32 %v956, %v1028
        %v1103 = vadd.f32 %v957, %v1097
        %v1104 = vadd.f32 %v958, %v1099
        %v1105 = vxor.u32 %v1101, 2147483648
        %v1106 = vmul.f32 %v1105, 1.442695
        %v1107 = vpow.pop %v1106
        %v1108 = vadd.f32 %v1107, 1.0
        %v1109 = vrcp.pop %v1108
        %v1110 = vmul.f32 1.0, %v1109
        %v1111 = vxor.u32 %v1102, 2147483648
        %v1112 = vmul.f32 %v1111, 1.442695
        %v1113 = vpow.pop %v1112
        %v1114 = vadd.f32 %v1113, 1.0
        %v1115 = vrcp.pop %v1114
        %v1116 = vmul.f32 1.0, %v1115
        %v1117 = vtanh.pop %v1103
        %v1118 = vxor.u32 %v1104, 2147483648
        %v1119 = vmul.f32 %v1118, 1.442695
        %v1120 = vpow.pop %v1119
        %v1121 = vadd.f32 %v1120, 1.0
        %v1122 = vrcp.pop %v1121
        %v1123 = vmul.f32 1.0, %v1122
        %v1124 = vmul.f32 %v1116, %v950
        %v1125 = vmul.f32 %v1110, %v1117
        %v1126 = vadd.f32 %v1124, %v1125
        %v1127 = vtanh.pop %v1126
        %v1128 = vmul.f32 %v1123, %v1127
        %s1129 = sadd.s32 %s761, 2
        %p1130 = scmp.lt.s32.totalorder %s1129, 8
        %s1131 = scalar_select %p1130, 1, 0
        %v1132 = vstv %s1131
        %vm1133 = vcmp.eq.s32.totalorder %v1132, 1
        %v1134 = vsel %vm1133, %v1126, %v950
        %v1135 = vsel %vm1133, %v1128, %v951
        %1136 = vst [vmem:[#allocation2] sm:$0xff] %v1135
        %1137 = vst [vmem:[#allocation3] sm:$0xff] %v1134
        %p1138 = scmp.eq.s32.totalorder %s26, 2
        // Predicated region
        $region105: #{tpu_custom_call.1} parent=23 // pred_check
          %p1139 = pneg %p1138
        $region106: #{tpu_custom_call.1} parent=23 // pred_check_branch
          %1141 = sbr.rel (%p1139) target = $region108
        $region107: #{tpu_custom_call.1} parent=23 // pred_region
          %v1142 = vld [vmem:[#allocation8] sm:$0xff]
          %v1143 = vld [vmem:[#allocation8 + $0x8] sm:$0xff]
          %v1144 = vld [vmem:[#allocation8 + $0x10] sm:$0xff]
          %v1145 = vld [vmem:[#allocation8 + $0x18] sm:$0xff]
          %v1146 = vld [vmem:[#allocation8 + $0x20] sm:$0xff]
          %v1147 = vld [vmem:[#allocation8 + $0x28] sm:$0xff]
          %v1148 = vld [vmem:[#allocation8 + $0x30] sm:$0xff]
          %v1149 = vld [vmem:[#allocation8 + $0x38] sm:$0xff]
          %v1150 = vld [vmem:[#allocation8 + $0x40] sm:$0xff]
          %v1151 = vld [vmem:[#allocation8 + $0x48] sm:$0xff]
          %v1152 = vld [vmem:[#allocation8 + $0x50] sm:$0xff]
          %v1153 = vld [vmem:[#allocation8 + $0x58] sm:$0xff]
          %v1154 = vld [vmem:[#allocation8 + $0x60] sm:$0xff]
          %v1155 = vld [vmem:[#allocation8 + $0x68] sm:$0xff]
          %v1156 = vld [vmem:[#allocation8 + $0x70] sm:$0xff]
          %v1157 = vld [vmem:[#allocation8 + $0x78] sm:$0xff]
          %v1158 = vld [vmem:[#allocation9] sm:$0x1]
          %v1160 = vlaneseq
          %v1161 = vshrl.u32 %v1160, 7
          %v1162 = vsub.s32 0, %v1161
          %v1163 = vrot.slane %v1158, %v1162
          %1165 = vmatprep.subr.mxu0 0.0
          %1166 = vmatpush1.msra.mxu0 %v1142
          %1167 = vmatprep.subr.mxu0 0.0
          %1168 = vmatpush1.msra.mxu0 %v1143
          %1169 = vmatprep.subr.mxu0 0.0
          %1170 = vmatpush1.msra.mxu0 %v1144
          %1171 = vmatprep.subr.mxu0 0.0
          %1172 = vmatpush1.msra.mxu0 %v1145
          %1173 = vmatprep.subr.mxu0 0.0
          %1174 = vmatpush1.msra.mxu0 %v1146
          %1175 = vmatprep.subr.mxu0 0.0
          %1176 = vmatpush1.msra.mxu0 %v1147
          %1177 = vmatprep.subr.mxu0 0.0
          %1178 = vmatpush1.msra.mxu0 %v1148
          %1179 = vmatprep.subr.mxu0 0.0
          %1180 = vmatpush1.msra.mxu0 %v1149
          %1181 = vmatprep.subr.mxu0 0.0
          %1182 = vmatpush1.msra.mxu0 %v1150
          %1183 = vmatprep.subr.mxu0 0.0
          %1184 = vmatpush1.msra.mxu0 %v1151
          %1185 = vmatprep.subr.mxu0 0.0
          %1186 = vmatpush1.msra.mxu0 %v1152
          %1187 = vmatprep.subr.mxu0 0.0
          %1188 = vmatpush1.msra.mxu0 %v1153
          %1189 = vmatprep.subr.mxu0 0.0
          %1190 = vmatpush1.msra.mxu0 %v1154
          %1191 = vmatprep.subr.mxu0 0.0
          %1192 = vmatpush1.msra.mxu0 %v1155
          %1193 = vmatprep.subr.mxu0 0.0
          %1194 = vmatpush1.msra.mxu0 %v1156
          %1195 = vmatprep.subr.mxu0 0.0
          %1196 = vmatpush1.msra.mxu0 %v1157
          %1197 = vmatprep.subr.mxu0 0.0
          %1198 = vmatpush1.msra.mxu0 0.0
          %1199 = vmatprep.subr.mxu0 0.0
          %1200 = vmatpush1.msra.mxu0 0.0
          %1201 = vmatprep.subr.mxu0 0.0
          %1202 = vmatpush1.msra.mxu0 0.0
          %1203 = vmatprep.subr.mxu0 0.0
          %1204 = vmatpush1.msra.mxu0 0.0
          %1205 = vmatprep.subr.mxu0 0.0
          %1206 = vmatpush1.msra.mxu0 0.0
          %1207 = vmatprep.subr.mxu0 0.0
          %1208 = vmatpush1.msra.mxu0 0.0
          %1209 = vmatprep.subr.mxu0 0.0
          %1210 = vmatpush1.msra.mxu0 0.0
          %1211 = vmatprep.subr.mxu0 0.0
          %1212 = vmatpush1.msra.mxu0 0.0
          %1213 = vmatprep.subr.mxu0 0.0
          %1214 = vmatpush1.msra.mxu0 0.0
          %1215 = vmatprep.subr.mxu0 0.0
          %1216 = vmatpush1.msra.mxu0 0.0
          %1217 = vmatprep.subr.mxu0 0.0
          %1218 = vmatpush1.msra.mxu0 0.0
          %1219 = vmatprep.subr.mxu0 0.0
          %1220 = vmatpush1.msra.mxu0 0.0
          %1221 = vmatprep.subr.mxu0 0.0
          %1222 = vmatpush1.msra.mxu0 0.0
          %1223 = vmatprep.subr.mxu0 0.0
          %1224 = vmatpush1.msra.mxu0 0.0
          %1225 = vmatprep.subr.mxu0 0.0
          %1226 = vmatpush1.msra.mxu0 0.0
          %1227 = vmatprep.subr.mxu0 0.0
          %1228 = vmatpush1.msra.mxu0 0.0
          %1229 = vmatprep.mubr.f32.mxu0 0.0
          %1230 = vmatmul.mubr.f32.gmra.mrb[0].mxu0 %v1135
          %v1231 = vpop.f32.mrb[0].mxu0
          %v1232 = vadd.f32 %v1163, %v1231
          %v1233 = vpop.f32.mrb[0].mxu0
          %1234 = vdwg.mxu0
          %v1235 = vlaneseq
          %v1236 = vand.u32 %v1235, 127
          %vm1237 = vcmp.lt.s32.totalorder %v1236, 4
          %v1238 = vsel %vm1237, %v1232, -1e+30
          %1239 = vmax.xlane.f32.xlu0 %v1238
          %v1240 = vpop.xlane.xlu0 %1239
          %v1241 = vsub.f32 %v1238, %v1240
          %v1242 = vmul.f32 %v1241, 1.442695
          %v1243 = vpow.pop %v1242
          %1244 = vadd.xlane.f32.xlu0 %v1243
          %v1245 = vpop.xlane.xlu0 %1244
          %v1246 = vrcp.pop %v1245
          %v1247 = vmul.f32 %v1243, %v1246
          %1248 = vst [vmem:[#allocation14] sm:$0xff] %v1247
        $region108: #{tpu_custom_call.1} parent=23 // pred_fallthru
          _
        // Predicated region
        $region109: #{tpu_custom_call.1} parent=23 // pred_check
          %p1249 = pneg %p79
        $region110: #{tpu_custom_call.1} parent=23 // pred_check_branch
          %1251 = sbr.rel (%p1249) target = $region112
        $region111: #{tpu_custom_call.1} parent=23 // pred_region
          %s1253 = ssub.s32 128, 128
          %1254 = vsyncadd [#allocation13], %s1253
          %s1255 = smul.addr %s25, 128
          %s1256 = scalar_lea.hbm %s6, %s1255
          %s1258 = sshll.u32 [#allocation14], 4
          %s1259 = int_to_ptr.vmem [resolvable:$true] %s1258
          %1261 = dma.vmem_to_hbm [thread:$0]  %s1259, 128, %s1256, [#allocation13]
        $region112: #{tpu_custom_call.1} parent=23 // pred_fallthru
          _
        // Predicated region
        $region113: #{tpu_custom_call.1} parent=23 // pred_check
          %p1262 = pneg %p79
        $region114: #{tpu_custom_call.1} parent=23 // pred_check_branch
          %1264 = sbr.rel (%p1262) target = $region116
        $region115: #{tpu_custom_call.1} parent=23 // pred_region
          %1265 = dma.done [#allocation13], 128
        $region116: #{tpu_custom_call.1} parent=23 // pred_fallthru
          _
      $region24: #{tpu_custom_call.1} parent=5 // pred_fallthru
        _
      %p1266 = scmp.le.s32.totalorder 2, %s16
      // Predicated region
      $region117: #{tpu_custom_call.1} parent=5 // pred_check
        %p1267 = pneg %p1266
      $region118: #{tpu_custom_call.1} parent=5 // pred_check_branch
        %1269 = sbr.rel (%p1267) target = $region120
      $region119: #{tpu_custom_call.1} parent=5 // pred_region
        %s1270 = ssub.s32 %s16, 2
      $region120: #{tpu_custom_call.1} parent=5 // pred_fallthru
        _
    $region6: #{tpu_custom_call.1} parent=1 // loop_footer
      %s20 = sadd.s32 1, %s16
    $region7: #{tpu_custom_call.1} parent=1 // loop_footer_branch
      %15 = sbr.rel target = $region3
    $region8: #{tpu_custom_call.1} parent=1 // loop_exit
      _
    %1271 = vsyncpa [#allocation12], 1
    %s1272 = scalar_lea.sflag [#allocation12], 1
    %1273 = vsyncpa %s1272, 1
    %1274 = vsyncpa [#allocation13], 1
    %s1275 = scalar_lea.sflag [#allocation13], 1
    %1276 = vsyncpa %s1275, 1
  %1277 = vsyncmov [#allocation10]
  %s1278 = vpop.sfrf %1277
  %p1279 = scmp.eq.s32.totalorder %s1278, 0
  %p1280 = pneg %p1279
  %1282 = shalt.err (%p1280)
  %s1283 = scalar_lea.sflag [#allocation10], 1
  %1284 = vsyncmov %s1283
  %s1285 = vpop.sfrf %1284
  %p1286 = scmp.eq.s32.totalorder %s1285, 0
  %p1287 = pneg %p1286
  %1289 = shalt.err (%p1287)
  %s1290 = scalar_lea.sflag [#allocation10], 2
  %1291 = vsyncmov %s1290
  %s1292 = vpop.sfrf %1291
  %p1293 = scmp.eq.s32.totalorder %s1292, 0
  %p1294 = pneg %p1293
  %1296 = shalt.err (%p1294)
  %s1297 = scalar_lea.sflag [#allocation10], 3
  %1298 = vsyncmov %s1297
  %s1299 = vpop.sfrf %1298
  %p1300 = scmp.eq.s32.totalorder %s1299, 0
  %p1301 = pneg %p1300
  %1303 = shalt.err (%p1301)
  %s1304 = scalar_lea.sflag [#allocation10], 4
  %1305 = vsyncmov %s1304
  %s1306 = vpop.sfrf %1305
  %p1307 = scmp.eq.s32.totalorder %s1306, 0
  %p1308 = pneg %p1307
  %1310 = shalt.err (%p1308)

</llo_original>
